<compile_context>
chip_gen: v7x
topology: tpu7x:2x2x1
jax: 0.10.0
libtpu: 0.0.40
codegen_flags: <defaults>
</compile_context>

<pallas_src>
import jax
import jax.numpy as jnp
from jax.experimental import pallas as pl
from jax.experimental.pallas import tpu as pltpu


def _round_up(x, m):
    return (x + m - 1) // m * m


def _gelu_exact(x):
    # PyTorch nn.GELU() default: exact (erf) formulation.
    return 0.5 * x * (1.0 + jax.lax.erf(x * 0.7071067811865476))


def _vmem_capacity_bytes():
    """Per-generation VMEM capacity (v5e/v6e: 128 MiB, v7x: 64 MiB)."""
    try:
        info = pltpu.get_tpu_info()
        cap = getattr(info, "vmem_capacity_bytes", None)
        if cap:
            return int(cap)
    except Exception:
        pass
    return 64 * 1024 * 1024  # conservative fallback (v7x per-TensorCore)


def dino_head_kernel(x_ref, w1_ref, b1_ref, w2_ref, b2_ref, w3_ref, b3_ref,
                     wl_ref, proj_ref, logits_ref, xn_ref):
    j = pl.program_id(1)

    # ---- per-batch-tile work: runs only once (j == 0) -----------------------
    @pl.when(j == 0)
    def _():
        xf = x_ref[...]                                   # f32 [BM, in_p]
        xb = xf.astype(jnp.bfloat16)

        # MLP projection head (bf16 MXU operands, f32 accumulation).
        h = jnp.dot(xb, w1_ref[...], preferred_element_type=jnp.float32)
        h = _gelu_exact(h + b1_ref[...])
        h = jnp.dot(h.astype(jnp.bfloat16), w2_ref[...],
                    preferred_element_type=jnp.float32)
        h = _gelu_exact(h + b2_ref[...])
        proj = jnp.dot(h.astype(jnp.bfloat16), w3_ref[...],
                       preferred_element_type=jnp.float32) + b3_ref[...]
        proj_ref[...] = proj.astype(proj_ref.dtype)

        # F.normalize(x, dim=-1, p=2): x / max(||x||, 1e-12) computed in f32,
        # cached in VMEM scratch so j > 0 steps reuse it.
        sq = jnp.sum(xf * xf, axis=-1, keepdims=True)
        xn_ref[...] = (xf * jax.lax.rsqrt(jnp.maximum(sq, 1e-24))).astype(xn_ref.dtype)

    # ---- logits tile: cached x_norm @ w_last (weight-norm hoisted) ----------
    logits = jnp.dot(xn_ref[...], wl_ref[...], preferred_element_type=jnp.float32)
    logits_ref[...] = logits.astype(logits_ref.dtype)


def text_dino_head_forward(x, params, *, bm_max=256):
    """x: [B, in_dim] float32.  params: dict (see init_params).

    Returns (x_proj [B, bottleneck_dim] f32, logits [B, out_dim] f32).
    """
    B, in_dim = x.shape
    hid = params["w1"].shape[1]
    bot = params["w3"].shape[1]
    out_dim = params["v"].shape[1]

    # Lane-dense padded feature dims.
    in_p = _round_up(in_dim, 128)
    hid_p = _round_up(hid, 128)
    bot_p = _round_up(bot, 128)
    out_p0 = _round_up(out_dim, 128)

    # Batch tiling: ensure >= 2 batch tiles when the batch allows it so the
    # "parallel" axis can shard across both v7x TensorCores (megacore).
    B8 = _round_up(B, 8)
    BM = bm_max if B8 >= bm_max else B8
    if B8 >= 16 and _round_up(B8, BM) // BM < 2:
        BM = _round_up((B8 + 1) // 2, 8)
    B_p = _round_up(B8, BM)

    # ---- generation-aware VMEM budget and out-dim tile selection ------------
    vmem_cap = _vmem_capacity_bytes()
    budget = int(0.85 * vmem_cap)

    def footprint(bn):
        # Worst-case (double-buffered weights) resident footprint estimate.
        weights = 2 * (2 * (in_p * hid_p + hid_p * hid_p + hid_p * bot_p)
                       + 4 * (2 * hid_p + bot_p))
        act = (2 * BM * in_p * 4        # x tile (f32, double-buffered)
               + 2 * BM * bot_p * 4     # proj output tile (f32)
               + 2 * BM * bn * 4        # logits output tile (f32)
               + 2 * in_p * bn * 2      # w_last tile (bf16)
               + BM * in_p * 2          # x_norm scratch (bf16)
               + 3 * BM * hid_p * 4)    # live f32 MLP intermediates (approx)
        return weights + act

    best = None
    for cand in (2048, 1024, 512, 256, 128):
        bn = min(cand, out_p0)
        fp = footprint(bn)
        if fp > budget and bn > 128:
            continue                     # too big for this generation's VMEM
        pad = _round_up(out_p0, bn) - out_p0
        key = (pad, -bn)                 # minimize padding, then prefer large BN
        if best is None or key < best[1]:
            best = (bn, key, fp)
    # TODO(synk): if even BN=128 with resident weights exceeds the budget
    # (hidden_dim >= ~4096 on v7x), K-tile the MLP matmuls (extra grid axis or
    # pltpu.emit_pipeline) instead of keeping w2 fully VMEM-resident.
    BN, _, fp_est = best
    out_p = _round_up(out_p0, BN)

    vmem_limit = int(min(int(0.9 * vmem_cap),
                         max(48 * 1024 * 1024, fp_est + (16 << 20))))

    # ---- hoist the weight-norm (g == 1): w_last = v / ||v||_col -------------
    v = params["v"].astype(jnp.float32)
    w_last = v / jnp.sqrt(jnp.sum(v * v, axis=0, keepdims=True))

    def pad2(a, r, c):
        return jnp.pad(a, ((0, r - a.shape[0]), (0, c - a.shape[1])))

    # x stays f32 (exact F.normalize); matmul weights are bf16; f32 biases.
    x_p = pad2(x.astype(jnp.float32), B_p, in_p)
    w1 = pad2(params["w1"], in_p, hid_p).astype(jnp.bfloat16)
    w2 = pad2(params["w2"], hid_p, hid_p).astype(jnp.bfloat16)
    w3 = pad2(params["w3"], hid_p, bot_p).astype(jnp.bfloat16)
    wl = pad2(w_last, in_p, out_p).astype(jnp.bfloat16)
    b1 = pad2(params["b1"].reshape(1, -1).astype(jnp.float32), 1, hid_p)
    b2 = pad2(params["b2"].reshape(1, -1).astype(jnp.float32), 1, hid_p)
    b3 = pad2(params["b3"].reshape(1, -1).astype(jnp.float32), 1, bot_p)

    grid = (B_p // BM, out_p // BN)

    out_shapes = (
        jax.ShapeDtypeStruct((B_p, bot_p), jnp.float32),
        jax.ShapeDtypeStruct((B_p, out_p), jnp.float32),
    )

    def make_call(single_buffer_weights):
        def wspec(shape):
            # Grid-invariant operands: single-buffer to halve resident VMEM.
            if single_buffer_weights:
                return pl.BlockSpec(shape, lambda i, j: (0, 0),
                                    pipeline_mode=pl.Buffered(1))
            return pl.BlockSpec(shape, lambda i, j: (0, 0))

        in_specs = [
            pl.BlockSpec((BM, in_p), lambda i, j: (i, 0)),   # x (kept across j)
            wspec((in_p, hid_p)),                            # w1
            wspec((1, hid_p)),                               # b1
            wspec((hid_p, hid_p)),                           # w2
            wspec((1, hid_p)),                               # b2
            wspec((hid_p, bot_p)),                           # w3
            wspec((1, bot_p)),                               # b3
            pl.BlockSpec((in_p, BN), lambda i, j: (0, j)),   # w_last, N-tiled
        ]
        out_specs = (
            pl.BlockSpec((BM, bot_p), lambda i, j: (i, 0)),  # proj (written j==0)
            pl.BlockSpec((BM, BN), lambda i, j: (i, j)),     # logits
        )
        return pl.pallas_call(
            dino_head_kernel,
            out_shape=out_shapes,
            grid=grid,
            in_specs=in_specs,
            out_specs=out_specs,
            scratch_shapes=[pltpu.VMEM((BM, in_p), jnp.bfloat16)],  # cached x_norm
            compiler_params=pltpu.CompilerParams(
                dimension_semantics=("parallel", "arbitrary"),
                vmem_limit_bytes=vmem_limit,
            ),
        )

    args = (x_p, w1, b1, w2, b2, w3, b3, wl)
    try:
        proj_p, logits_p = make_call(True)(*args)
    except Exception:
        # Fallback: this JAX version rejects pipeline_mode=pl.Buffered(1) on a
        # pallas_call BlockSpec -> use default double buffering.
        proj_p, logits_p = make_call(False)(*args)

    return proj_p[:B, :bot], logits_p[:B, :out_dim]


def init_params(key, in_dim, out_dim, hidden_dim, bottleneck_dim):
    """Synthetic init mirroring the module: trunc-normal(std=0.02) linears with
    zero bias; raw direction vectors v for the weight-normed last layer (g==1).
    Weights stored transposed ([in, out]) for x @ W."""
    k1, k2, k3, k4 = jax.random.split(key, 4)
    std = 0.02
    return {
        "w1": jax.random.truncated_normal(k1, -2.0, 2.0, (in_dim, hidden_dim),
                                          jnp.float32) * std,
        "b1": jnp.zeros((hidden_dim,), jnp.float32),
        "w2": jax.random.truncated_normal(k2, -2.0, 2.0, (hidden_dim, hidden_dim),
                                          jnp.float32) * std,
        "b2": jnp.zeros((hidden_dim,), jnp.float32),
        "w3": jax.random.truncated_normal(k3, -2.0, 2.0, (hidden_dim, bottleneck_dim),
                                          jnp.float32) * std,
        "b3": jnp.zeros((bottleneck_dim,), jnp.float32),
        "v": jax.random.normal(k4, (in_dim, out_dim), jnp.float32),
    }


if __name__ == "__main__":
    # Small shapes consistent with the module: x is [batch, in_dim].
    B, in_dim, hidden_dim, bottleneck_dim, out_dim = 8, 32, 64, 32, 16

    key = jax.random.PRNGKey(0)
    kx, kp = jax.random.split(key)
    x = jax.random.normal(kx, (B, in_dim), jnp.float32)
    params = init_params(kp, in_dim, out_dim, hidden_dim, bottleneck_dim)

    x_proj, logits = text_dino_head_forward(x, params)
    jax.block_until_ready((x_proj, logits))

    assert x_proj.shape == (B, bottleneck_dim)
    assert logits.shape == (B, out_dim)

    # Pure-JAX f32 reference (exact PyTorch semantics) for a sanity check.
    # Kernel uses bf16 matmul operands with f32 accumulation -> loose tolerance.
    h = x @ params["w1"] + params["b1"]
    h = 0.5 * h * (1.0 + jax.lax.erf(h / jnp.sqrt(2.0)))
    h = h @ params["w2"] + params["b2"]
    h = 0.5 * h * (1.0 + jax.lax.erf(h / jnp.sqrt(2.0)))
    proj_ref = h @ params["w3"] + params["b3"]
    x_n = x / jnp.maximum(jnp.linalg.norm(x, axis=-1, keepdims=True), 1e-12)
    w_last_ref = params["v"] / jnp.linalg.norm(params["v"], axis=0, keepdims=True)
    logits_ref = x_n @ w_last_ref

    assert jnp.allclose(x_proj, proj_ref, atol=2e-2, rtol=2e-2), \
        float(jnp.max(jnp.abs(x_proj - proj_ref)))
    assert jnp.allclose(logits, logits_ref, atol=2e-2, rtol=2e-2), \
        float(jnp.max(jnp.abs(logits - logits_ref)))

    print("KERNEL_OK")
</pallas_src>

<mosaic_0001>
module attributes {stable_mosaic.version = 11 : i64} {
  func.func @dino_head_kernel(%arg0: i32, %arg1: i32, %arg2: memref<8x128xf32, #tpu.memory_space<vmem>>, %arg3: memref<128x128xbf16, #tpu.memory_space<vmem>>, %arg4: memref<1x128xf32, #tpu.memory_space<vmem>>, %arg5: memref<128x128xbf16, #tpu.memory_space<vmem>>, %arg6: memref<1x128xf32, #tpu.memory_space<vmem>>, %arg7: memref<128x128xbf16, #tpu.memory_space<vmem>>, %arg8: memref<1x128xf32, #tpu.memory_space<vmem>>, %arg9: memref<128x128xbf16, #tpu.memory_space<vmem>>, %arg10: memref<8x128xf32, #tpu.memory_space<vmem>>, %arg11: memref<8x128xf32, #tpu.memory_space<vmem>>, %arg12: memref<8x128xbf16, #tpu.memory_space<vmem>>) attributes {dimension_semantics = [#tpu.dimension_semantics<parallel>, #tpu.dimension_semantics<arbitrary>], iteration_bounds = array<i64: 1, 1>, scalar_prefetch = 0 : i64, scratch_operands = 1 : i64, tpu.core_type = #tpu.core_type<tc>, window_params = [{transform_indices = @transform_0, window_bounds = array<i64: 8, 128>}, {pipeline_mode = #tpu.pipeline_mode<synchronous>, transform_indices = @transform_1, window_bounds = array<i64: 128, 128>}, {pipeline_mode = #tpu.pipeline_mode<synchronous>, transform_indices = @transform_2, window_bounds = array<i64: 1, 128>}, {pipeline_mode = #tpu.pipeline_mode<synchronous>, transform_indices = @transform_3, window_bounds = array<i64: 128, 128>}, {pipeline_mode = #tpu.pipeline_mode<synchronous>, transform_indices = @transform_4, window_bounds = array<i64: 1, 128>}, {pipeline_mode = #tpu.pipeline_mode<synchronous>, transform_indices = @transform_5, window_bounds = array<i64: 128, 128>}, {pipeline_mode = #tpu.pipeline_mode<synchronous>, transform_indices = @transform_6, window_bounds = array<i64: 1, 128>}, {transform_indices = @transform_7, window_bounds = array<i64: 128, 128>}, {transform_indices = @transform_8, window_bounds = array<i64: 8, 128>}, {transform_indices = @transform_9, window_bounds = array<i64: 8, 128>}]} {
    %c0_i32 = arith.constant 0 : i32
    %0 = arith.cmpi eq, %arg1, %c0_i32 : i32
    %1 = arith.extui %0 : i1 to i32
    %c0_i32_0 = arith.constant 0 : i32
    %2 = arith.cmpi ne, %1, %c0_i32_0 : i32
    scf.if %2 {
      %c0_6 = arith.constant 0 : index
      %c0_7 = arith.constant 0 : index
      %7 = vector.load %arg2[%c0_6, %c0_7] : memref<8x128xf32, #tpu.memory_space<vmem>>, vector<8x128xf32>
      %8 = arith.truncf %7 : vector<8x128xf32> to vector<8x128xbf16>
      %c0_8 = arith.constant 0 : index
      %c0_9 = arith.constant 0 : index
      %9 = vector.load %arg3[%c0_8, %c0_9] : memref<128x128xbf16, #tpu.memory_space<vmem>>, vector<128x128xbf16>
      %cst_10 = arith.constant dense<0.000000e+00> : vector<8x128xf32>
      %10 = tpu.matmul %8, %9, %cst_10 {dimension_numbers = #tpu.dot_dimension_numbers<[1], [0], [0], [1], [0, 0, 1, 1], [], []>} : vector<8x128xbf16>, vector<128x128xbf16>, vector<8x128xf32> -> vector<8x128xf32>
      %c0_11 = arith.constant 0 : index
      %c0_12 = arith.constant 0 : index
      %11 = vector.load %arg4[%c0_11, %c0_12] : memref<1x128xf32, #tpu.memory_space<vmem>>, vector<1x128xf32>
      %12 = vector.broadcast %11 : vector<1x128xf32> to vector<8x128xf32>
      %13 = arith.addf %10, %12 : vector<8x128xf32>
      %cst_13 = arith.constant 5.000000e-01 : f32
      %14 = vector.broadcast %cst_13 : f32 to vector<8x128xf32>
      %15 = arith.mulf %14, %13 : vector<8x128xf32>
      %cst_14 = arith.constant 0.707106769 : f32
      %16 = vector.broadcast %cst_14 : f32 to vector<8x128xf32>
      %17 = arith.mulf %13, %16 : vector<8x128xf32>
      %18 = math.erf %17 : vector<8x128xf32>
      %cst_15 = arith.constant 1.000000e+00 : f32
      %19 = vector.broadcast %cst_15 : f32 to vector<8x128xf32>
      %20 = arith.addf %19, %18 : vector<8x128xf32>
      %21 = arith.mulf %15, %20 : vector<8x128xf32>
      %22 = arith.truncf %21 : vector<8x128xf32> to vector<8x128xbf16>
      %c0_16 = arith.constant 0 : index
      %c0_17 = arith.constant 0 : index
      %23 = vector.load %arg5[%c0_16, %c0_17] : memref<128x128xbf16, #tpu.memory_space<vmem>>, vector<128x128xbf16>
      %cst_18 = arith.constant dense<0.000000e+00> : vector<8x128xf32>
      %24 = tpu.matmul %22, %23, %cst_18 {dimension_numbers = #tpu.dot_dimension_numbers<[1], [0], [0], [1], [0, 0, 1, 1], [], []>} : vector<8x128xbf16>, vector<128x128xbf16>, vector<8x128xf32> -> vector<8x128xf32>
      %c0_19 = arith.constant 0 : index
      %c0_20 = arith.constant 0 : index
      %25 = vector.load %arg6[%c0_19, %c0_20] : memref<1x128xf32, #tpu.memory_space<vmem>>, vector<1x128xf32>
      %26 = vector.broadcast %25 : vector<1x128xf32> to vector<8x128xf32>
      %27 = arith.addf %24, %26 : vector<8x128xf32>
      %cst_21 = arith.constant 5.000000e-01 : f32
      %28 = vector.broadcast %cst_21 : f32 to vector<8x128xf32>
      %29 = arith.mulf %28, %27 : vector<8x128xf32>
      %cst_22 = arith.constant 0.707106769 : f32
      %30 = vector.broadcast %cst_22 : f32 to vector<8x128xf32>
      %31 = arith.mulf %27, %30 : vector<8x128xf32>
      %32 = math.erf %31 : vector<8x128xf32>
      %cst_23 = arith.constant 1.000000e+00 : f32
      %33 = vector.broadcast %cst_23 : f32 to vector<8x128xf32>
      %34 = arith.addf %33, %32 : vector<8x128xf32>
      %35 = arith.mulf %29, %34 : vector<8x128xf32>
      %36 = arith.truncf %35 : vector<8x128xf32> to vector<8x128xbf16>
      %c0_24 = arith.constant 0 : index
      %c0_25 = arith.constant 0 : index
      %37 = vector.load %arg7[%c0_24, %c0_25] : memref<128x128xbf16, #tpu.memory_space<vmem>>, vector<128x128xbf16>
      %cst_26 = arith.constant dense<0.000000e+00> : vector<8x128xf32>
      %38 = tpu.matmul %36, %37, %cst_26 {dimension_numbers = #tpu.dot_dimension_numbers<[1], [0], [0], [1], [0, 0, 1, 1], [], []>} : vector<8x128xbf16>, vector<128x128xbf16>, vector<8x128xf32> -> vector<8x128xf32>
      %c0_27 = arith.constant 0 : index
      %c0_28 = arith.constant 0 : index
      %39 = vector.load %arg8[%c0_27, %c0_28] : memref<1x128xf32, #tpu.memory_space<vmem>>, vector<1x128xf32>
      %40 = vector.broadcast %39 : vector<1x128xf32> to vector<8x128xf32>
      %41 = arith.addf %38, %40 : vector<8x128xf32>
      %c0_29 = arith.constant 0 : index
      %c0_30 = arith.constant 0 : index
      %42 = vector.load %arg10[%c0_29, %c0_30] : memref<8x128xf32, #tpu.memory_space<vmem>>, vector<8x128xf32>
      tpu.vector_store %arg10[%c0_29, %c0_30], %41 {strides = array<i32>} : memref<8x128xf32, #tpu.memory_space<vmem>>, vector<8x128xf32>,
      %43 = arith.mulf %7, %7 : vector<8x128xf32>
      %cst_31 = arith.constant dense<0.000000e+00> : vector<8xf32>
      %44 = vector.multi_reduction <add>, %43, %cst_31 [1] : vector<8x128xf32> to vector<8xf32>
      %45 = vector.shape_cast %44 : vector<8xf32> to vector<8x1xf32>
      %cst_32 = arith.constant 1.000000e-24 : f32
      %46 = vector.broadcast %cst_32 : f32 to vector<8x1xf32>
      %47 = arith.maximumf %45, %46 : vector<8x1xf32>
      %48 = math.rsqrt %47 : vector<8x1xf32>
      %49 = vector.broadcast %48 : vector<8x1xf32> to vector<8x128xf32>
      %50 = arith.mulf %7, %49 : vector<8x128xf32>
      %51 = arith.truncf %50 : vector<8x128xf32> to vector<8x128xbf16>
      %c0_33 = arith.constant 0 : index
      %c0_34 = arith.constant 0 : index
      %52 = vector.load %arg12[%c0_33, %c0_34] : memref<8x128xbf16, #tpu.memory_space<vmem>>, vector<8x128xbf16>
      tpu.vector_store %arg12[%c0_33, %c0_34], %51 {strides = array<i32>} : memref<8x128xbf16, #tpu.memory_space<vmem>>, vector<8x128xbf16>,
    } else {
    }
    %c0 = arith.constant 0 : index
    %c0_1 = arith.constant 0 : index
    %3 = vector.load %arg12[%c0, %c0_1] : memref<8x128xbf16, #tpu.memory_space<vmem>>, vector<8x128xbf16>
    %c0_2 = arith.constant 0 : index
    %c0_3 = arith.constant 0 : index
    %4 = vector.load %arg9[%c0_2, %c0_3] : memref<128x128xbf16, #tpu.memory_space<vmem>>, vector<128x128xbf16>
    %cst = arith.constant dense<0.000000e+00> : vector<8x128xf32>
    %5 = tpu.matmul %3, %4, %cst {dimension_numbers = #tpu.dot_dimension_numbers<[1], [0], [0], [1], [0, 0, 1, 1], [], []>} : vector<8x128xbf16>, vector<128x128xbf16>, vector<8x128xf32> -> vector<8x128xf32>
    %c0_4 = arith.constant 0 : index
    %c0_5 = arith.constant 0 : index
    %6 = vector.load %arg11[%c0_4, %c0_5] : memref<8x128xf32, #tpu.memory_space<vmem>>, vector<8x128xf32>
    tpu.vector_store %arg11[%c0_4, %c0_5], %5 {strides = array<i32>} : memref<8x128xf32, #tpu.memory_space<vmem>>, vector<8x128xf32>,
    return
  }
  func.func @transform_0(%arg0: i32, %arg1: i32) -> (i32, i32) {
    %c0_i32 = arith.constant 0 : i32
    %c0_i32_0 = arith.constant 0 : i32
    return %arg0, %c0_i32 : i32, i32
  }
  func.func @transform_1(%arg0: i32, %arg1: i32) -> (i32, i32) {
    %c0_i32 = arith.constant 0 : i32
    %c0_i32_0 = arith.constant 0 : i32
    %c0_i32_1 = arith.constant 0 : i32
    return %c0_i32, %c0_i32_0 : i32, i32
  }
  func.func @transform_2(%arg0: i32, %arg1: i32) -> (i32, i32) {
    %c0_i32 = arith.constant 0 : i32
    %c0_i32_0 = arith.constant 0 : i32
    %c0_i32_1 = arith.constant 0 : i32
    return %c0_i32, %c0_i32_0 : i32, i32
  }
  func.func @transform_3(%arg0: i32, %arg1: i32) -> (i32, i32) {
    %c0_i32 = arith.constant 0 : i32
    %c0_i32_0 = arith.constant 0 : i32
    %c0_i32_1 = arith.constant 0 : i32
    return %c0_i32, %c0_i32_0 : i32, i32
  }
  func.func @transform_4(%arg0: i32, %arg1: i32) -> (i32, i32) {
    %c0_i32 = arith.constant 0 : i32
    %c0_i32_0 = arith.constant 0 : i32
    %c0_i32_1 = arith.constant 0 : i32
    return %c0_i32, %c0_i32_0 : i32, i32
  }
  func.func @transform_5(%arg0: i32, %arg1: i32) -> (i32, i32) {
    %c0_i32 = arith.constant 0 : i32
    %c0_i32_0 = arith.constant 0 : i32
    %c0_i32_1 = arith.constant 0 : i32
    return %c0_i32, %c0_i32_0 : i32, i32
  }
  func.func @transform_6(%arg0: i32, %arg1: i32) -> (i32, i32) {
    %c0_i32 = arith.constant 0 : i32
    %c0_i32_0 = arith.constant 0 : i32
    %c0_i32_1 = arith.constant 0 : i32
    return %c0_i32, %c0_i32_0 : i32, i32
  }
  func.func @transform_7(%arg0: i32, %arg1: i32) -> (i32, i32) {
    %c0_i32 = arith.constant 0 : i32
    %c0_i32_0 = arith.constant 0 : i32
    return %c0_i32, %arg1 : i32, i32
  }
  func.func @transform_8(%arg0: i32, %arg1: i32) -> (i32, i32) {
    %c0_i32 = arith.constant 0 : i32
    %c0_i32_0 = arith.constant 0 : i32
    return %arg0, %c0_i32 : i32, i32
  }
  func.func @transform_9(%arg0: i32, %arg1: i32) -> (i32, i32) {
    %c0_i32 = arith.constant 0 : i32
    return %arg0, %arg1 : i32, i32
  }
}

module attributes {stable_mosaic.version = 11 : i64} {
  func.func @dino_head_kernel(%arg0: i32, %arg1: i32, %arg2: memref<8x128xf32, #tpu.memory_space<vmem>>, %arg3: memref<128x128xbf16, #tpu.memory_space<vmem>>, %arg4: memref<1x128xf32, #tpu.memory_space<vmem>>, %arg5: memref<128x128xbf16, #tpu.memory_space<vmem>>, %arg6: memref<1x128xf32, #tpu.memory_space<vmem>>, %arg7: memref<128x128xbf16, #tpu.memory_space<vmem>>, %arg8: memref<1x128xf32, #tpu.memory_space<vmem>>, %arg9: memref<128x128xbf16, #tpu.memory_space<vmem>>, %arg10: memref<8x128xf32, #tpu.memory_space<vmem>>, %arg11: memref<8x128xf32, #tpu.memory_space<vmem>>, %arg12: memref<8x128xbf16, #tpu.memory_space<vmem>>) attributes {dimension_semantics = [#tpu.dimension_semantics<parallel>, #tpu.dimension_semantics<arbitrary>], iteration_bounds = array<i64: 1, 1>, scalar_prefetch = 0 : i64, scratch_operands = 1 : i64, tpu.core_type = #tpu.core_type<tc>, window_params = [{transform_indices = @transform_0, window_bounds = array<i64: 8, 128>}, {pipeline_mode = #tpu.pipeline_mode<synchronous>, transform_indices = @transform_1, window_bounds = array<i64: 128, 128>}, {pipeline_mode = #tpu.pipeline_mode<synchronous>, transform_indices = @transform_2, window_bounds = array<i64: 1, 128>}, {pipeline_mode = #tpu.pipeline_mode<synchronous>, transform_indices = @transform_3, window_bounds = array<i64: 128, 128>}, {pipeline_mode = #tpu.pipeline_mode<synchronous>, transform_indices = @transform_4, window_bounds = array<i64: 1, 128>}, {pipeline_mode = #tpu.pipeline_mode<synchronous>, transform_indices = @transform_5, window_bounds = array<i64: 128, 128>}, {pipeline_mode = #tpu.pipeline_mode<synchronous>, transform_indices = @transform_6, window_bounds = array<i64: 1, 128>}, {transform_indices = @transform_7, window_bounds = array<i64: 128, 128>}, {transform_indices = @transform_8, window_bounds = array<i64: 8, 128>}, {transform_indices = @transform_9, window_bounds = array<i64: 8, 128>}]} {
    %c0_i32 = arith.constant 0 : i32
    %0 = arith.cmpi eq, %arg1, %c0_i32 : i32
    %1 = arith.extui %0 : i1 to i32
    %c0_i32_0 = arith.constant 0 : i32
    %2 = arith.cmpi ne, %1, %c0_i32_0 : i32
    scf.if %2 {
      %c0_6 = arith.constant 0 : index
      %c0_7 = arith.constant 0 : index
      %7 = vector.load %arg2[%c0_6, %c0_7] : memref<8x128xf32, #tpu.memory_space<vmem>>, vector<8x128xf32>
      %8 = arith.truncf %7 : vector<8x128xf32> to vector<8x128xbf16>
      %c0_8 = arith.constant 0 : index
      %c0_9 = arith.constant 0 : index
      %9 = vector.load %arg3[%c0_8, %c0_9] : memref<128x128xbf16, #tpu.memory_space<vmem>>, vector<128x128xbf16>
      %cst_10 = arith.constant dense<0.000000e+00> : vector<8x128xf32>
      %10 = tpu.matmul %8, %9, %cst_10 {dimension_numbers = #tpu.dot_dimension_numbers<[1], [0], [0], [1], [0, 0, 1, 1], [], []>} : vector<8x128xbf16>, vector<128x128xbf16>, vector<8x128xf32> -> vector<8x128xf32>
      %c0_11 = arith.constant 0 : index
      %c0_12 = arith.constant 0 : index
      %11 = vector.load %arg4[%c0_11, %c0_12] : memref<1x128xf32, #tpu.memory_space<vmem>>, vector<1x128xf32>
      %12 = vector.broadcast %11 : vector<1x128xf32> to vector<8x128xf32>
      %13 = arith.addf %10, %12 : vector<8x128xf32>
      %cst_13 = arith.constant 5.000000e-01 : f32
      %14 = vector.broadcast %cst_13 : f32 to vector<8x128xf32>
      %15 = arith.mulf %14, %13 : vector<8x128xf32>
      %cst_14 = arith.constant 0.707106769 : f32
      %16 = vector.broadcast %cst_14 : f32 to vector<8x128xf32>
      %17 = arith.mulf %13, %16 : vector<8x128xf32>
      %18 = math.erf %17 : vector<8x128xf32>
      %cst_15 = arith.constant 1.000000e+00 : f32
      %19 = vector.broadcast %cst_15 : f32 to vector<8x128xf32>
      %20 = arith.addf %19, %18 : vector<8x128xf32>
      %21 = arith.mulf %15, %20 : vector<8x128xf32>
      %22 = arith.truncf %21 : vector<8x128xf32> to vector<8x128xbf16>
      %c0_16 = arith.constant 0 : index
      %c0_17 = arith.constant 0 : index
      %23 = vector.load %arg5[%c0_16, %c0_17] : memref<128x128xbf16, #tpu.memory_space<vmem>>, vector<128x128xbf16>
      %cst_18 = arith.constant dense<0.000000e+00> : vector<8x128xf32>
      %24 = tpu.matmul %22, %23, %cst_18 {dimension_numbers = #tpu.dot_dimension_numbers<[1], [0], [0], [1], [0, 0, 1, 1], [], []>} : vector<8x128xbf16>, vector<128x128xbf16>, vector<8x128xf32> -> vector<8x128xf32>
      %c0_19 = arith.constant 0 : index
      %c0_20 = arith.constant 0 : index
      %25 = vector.load %arg6[%c0_19, %c0_20] : memref<1x128xf32, #tpu.memory_space<vmem>>, vector<1x128xf32>
      %26 = vector.broadcast %25 : vector<1x128xf32> to vector<8x128xf32>
      %27 = arith.addf %24, %26 : vector<8x128xf32>
      %cst_21 = arith.constant 5.000000e-01 : f32
      %28 = vector.broadcast %cst_21 : f32 to vector<8x128xf32>
      %29 = arith.mulf %28, %27 : vector<8x128xf32>
      %cst_22 = arith.constant 0.707106769 : f32
      %30 = vector.broadcast %cst_22 : f32 to vector<8x128xf32>
      %31 = arith.mulf %27, %30 : vector<8x128xf32>
      %32 = math.erf %31 : vector<8x128xf32>
      %cst_23 = arith.constant 1.000000e+00 : f32
      %33 = vector.broadcast %cst_23 : f32 to vector<8x128xf32>
      %34 = arith.addf %33, %32 : vector<8x128xf32>
      %35 = arith.mulf %29, %34 : vector<8x128xf32>
      %36 = arith.truncf %35 : vector<8x128xf32> to vector<8x128xbf16>
      %c0_24 = arith.constant 0 : index
      %c0_25 = arith.constant 0 : index
      %37 = vector.load %arg7[%c0_24, %c0_25] : memref<128x128xbf16, #tpu.memory_space<vmem>>, vector<128x128xbf16>
      %cst_26 = arith.constant dense<0.000000e+00> : vector<8x128xf32>
      %38 = tpu.matmul %36, %37, %cst_26 {dimension_numbers = #tpu.dot_dimension_numbers<[1], [0], [0], [1], [0, 0, 1, 1], [], []>} : vector<8x128xbf16>, vector<128x128xbf16>, vector<8x128xf32> -> vector<8x128xf32>
      %c0_27 = arith.constant 0 : index
      %c0_28 = arith.constant 0 : index
      %39 = vector.load %arg8[%c0_27, %c0_28] : memref<1x128xf32, #tpu.memory_space<vmem>>, vector<1x128xf32>
      %40 = vector.broadcast %39 : vector<1x128xf32> to vector<8x128xf32>
      %41 = arith.addf %38, %40 : vector<8x128xf32>
      %c0_29 = arith.constant 0 : index
      %c0_30 = arith.constant 0 : index
      %42 = vector.load %arg10[%c0_29, %c0_30] : memref<8x128xf32, #tpu.memory_space<vmem>>, vector<8x128xf32>
      tpu.vector_store %arg10[%c0_29, %c0_30], %41 {strides = array<i32>} : memref<8x128xf32, #tpu.memory_space<vmem>>, vector<8x128xf32>,
      %43 = arith.mulf %7, %7 : vector<8x128xf32>
      %cst_31 = arith.constant dense<0.000000e+00> : vector<8xf32>
      %44 = vector.multi_reduction <add>, %43, %cst_31 [1] : vector<8x128xf32> to vector<8xf32>
      %45 = vector.shape_cast %44 : vector<8xf32> to vector<8x1xf32>
      %cst_32 = arith.constant 1.000000e-24 : f32
      %46 = vector.broadcast %cst_32 : f32 to vector<8x1xf32>
      %47 = arith.maximumf %45, %46 : vector<8x1xf32>
      %48 = math.rsqrt %47 : vector<8x1xf32>
      %49 = vector.broadcast %48 : vector<8x1xf32> to vector<8x128xf32>
      %50 = arith.mulf %7, %49 : vector<8x128xf32>
      %51 = arith.truncf %50 : vector<8x128xf32> to vector<8x128xbf16>
      %c0_33 = arith.constant 0 : index
      %c0_34 = arith.constant 0 : index
      %52 = vector.load %arg12[%c0_33, %c0_34] : memref<8x128xbf16, #tpu.memory_space<vmem>>, vector<8x128xbf16>
      tpu.vector_store %arg12[%c0_33, %c0_34], %51 {strides = array<i32>} : memref<8x128xbf16, #tpu.memory_space<vmem>>, vector<8x128xbf16>,
    } else {
    }
    %c0 = arith.constant 0 : index
    %c0_1 = arith.constant 0 : index
    %3 = vector.load %arg12[%c0, %c0_1] : memref<8x128xbf16, #tpu.memory_space<vmem>>, vector<8x128xbf16>
    %c0_2 = arith.constant 0 : index
    %c0_3 = arith.constant 0 : index
    %4 = vector.load %arg9[%c0_2, %c0_3] : memref<128x128xbf16, #tpu.memory_space<vmem>>, vector<128x128xbf16>
    %cst = arith.constant dense<0.000000e+00> : vector<8x128xf32>
    %5 = tpu.matmul %3, %4, %cst {dimension_numbers = #tpu.dot_dimension_numbers<[1], [0], [0], [1], [0, 0, 1, 1], [], []>} : vector<8x128xbf16>, vector<128x128xbf16>, vector<8x128xf32> -> vector<8x128xf32>
    %c0_4 = arith.constant 0 : index
    %c0_5 = arith.constant 0 : index
    %6 = vector.load %arg11[%c0_4, %c0_5] : memref<8x128xf32, #tpu.memory_space<vmem>>, vector<8x128xf32>
    tpu.vector_store %arg11[%c0_4, %c0_5], %5 {strides = array<i32>} : memref<8x128xf32, #tpu.memory_space<vmem>>, vector<8x128xf32>,
    return
  }
  func.func @transform_0(%arg0: i32, %arg1: i32) -> (i32, i32) {
    %c0_i32 = arith.constant 0 : i32
    %c0_i32_0 = arith.constant 0 : i32
    return %arg0, %c0_i32 : i32, i32
  }
  func.func @transform_1(%arg0: i32, %arg1: i32) -> (i32, i32) {
    %c0_i32 = arith.constant 0 : i32
    %c0_i32_0 = arith.constant 0 : i32
    %c0_i32_1 = arith.constant 0 : i32
    return %c0_i32, %c0_i32_0 : i32, i32
  }
  func.func @transform_2(%arg0: i32, %arg1: i32) -> (i32, i32) {
    %c0_i32 = arith.constant 0 : i32
    %c0_i32_0 = arith.constant 0 : i32
    %c0_i32_1 = arith.constant 0 : i32
    return %c0_i32, %c0_i32_0 : i32, i32
  }
  func.func @transform_3(%arg0: i32, %arg1: i32) -> (i32, i32) {
    %c0_i32 = arith.constant 0 : i32
    %c0_i32_0 = arith.constant 0 : i32
    %c0_i32_1 = arith.constant 0 : i32
    return %c0_i32, %c0_i32_0 : i32, i32
  }
  func.func @transform_4(%arg0: i32, %arg1: i32) -> (i32, i32) {
    %c0_i32 = arith.constant 0 : i32
    %c0_i32_0 = arith.constant 0 : i32
    %c0_i32_1 = arith.constant 0 : i32
    return %c0_i32, %c0_i32_0 : i32, i32
  }
  func.func @transform_5(%arg0: i32, %arg1: i32) -> (i32, i32) {
    %c0_i32 = arith.constant 0 : i32
    %c0_i32_0 = arith.constant 0 : i32
    %c0_i32_1 = arith.constant 0 : i32
    return %c0_i32, %c0_i32_0 : i32, i32
  }
  func.func @transform_6(%arg0: i32, %arg1: i32) -> (i32, i32) {
    %c0_i32 = arith.constant 0 : i32
    %c0_i32_0 = arith.constant 0 : i32
    %c0_i32_1 = arith.constant 0 : i32
    return %c0_i32, %c0_i32_0 : i32, i32
  }
  func.func @transform_7(%arg0: i32, %arg1: i32) -> (i32, i32) {
    %c0_i32 = arith.constant 0 : i32
    %c0_i32_0 = arith.constant 0 : i32
    return %c0_i32, %arg1 : i32, i32
  }
  func.func @transform_8(%arg0: i32, %arg1: i32) -> (i32, i32) {
    %c0_i32 = arith.constant 0 : i32
    %c0_i32_0 = arith.constant 0 : i32
    return %arg0, %c0_i32 : i32, i32
  }
  func.func @transform_9(%arg0: i32, %arg1: i32) -> (i32, i32) {
    %c0_i32 = arith.constant 0 : i32
    return %arg0, %arg1 : i32, i32
  }
}

</mosaic_0001>

<llo_original>
// kernel: tpu_custom_call.1
$region0: #{tpu_custom_call.1}
  #allocation0 [shape = 'u32[]', space=smem, size = 0x4, offset = 0x4, fixed_abs, tag = 'smem constant byte address 0x4 - core index']
  #allocation1 [shape = 'u32[144,128]{1,0:T(1,128)}', space=vmem, size = 0x12000, scoped, tag = 'internal scratch']
  #allocation2 [shape = 'bf16[8,128]{1,0:T(8,128)(2,1)}', space=vmem, size = 0x800, scoped, tag = 'scratch operand']
  %s0 = inlined_call_operand.hbm [shape: f32[8,128], index: 0, kind: input, shape index: {}]
  %s1 = inlined_call_operand.hbm [shape: bf16[128,128], index: 1, kind: input, shape index: {}]
  %s2 = inlined_call_operand.vmem [shape: f32[1,128], index: 2, kind: input, shape index: {}]
  %s3 = inlined_call_operand.hbm [shape: bf16[128,128], index: 3, kind: input, shape index: {}]
  %s4 = inlined_call_operand.vmem [shape: f32[1,128], index: 4, kind: input, shape index: {}]
  %s5 = inlined_call_operand.hbm [shape: bf16[128,128], index: 5, kind: input, shape index: {}]
  %s6 = inlined_call_operand.vmem [shape: f32[1,128], index: 6, kind: input, shape index: {}]
  %s7 = inlined_call_operand.hbm [shape: bf16[128,128], index: 7, kind: input, shape index: {}]
  %s8 = inlined_call_operand.hbm [shape: f32[8,128], index: 8, kind: output, shape index: {0}]
  %s9 = inlined_call_operand.hbm [shape: f32[8,128], index: 9, kind: output, shape index: {1}]
  %10 = xla_tuple %s8, %s9
  %s11 = sld [smem:[#allocation0]]
  $region74: #{tpu_custom_call.1} parent=0
    _
  %s13 = ssub.s32 1, %s11
  %s14 = scalar_select 0, %s13, %s11
  $region1: #{tpu_custom_call.1} parent=0
    #allocation3 [shape = 'u8[4096]{0}', space=vmem, size = 0x1000, scoped, tag = 'input window, operand 0, single buffered']
    #allocation4 [shape = 's32[1]{0}', space=sflag, size = 0x4, scoped, tag = 'scoped memory for tpu_custom_call.1']
    #allocation5 [shape = 's32[1]{0}', space=sflag, size = 0x4, scoped, tag = 'scoped memory for tpu_custom_call.1']
    #allocation6 [shape = 'u8[32768]{0}', space=vmem, size = 0x8000, scoped, tag = 'input window, operand 1, single buffered']
    #allocation7 [shape = 's32[1]{0}', space=sflag, size = 0x4, scoped, tag = 'scoped memory for tpu_custom_call.1']
    #allocation8 [shape = 'u8[32768]{0}', space=vmem, size = 0x8000, scoped, tag = 'input window, operand 3, single buffered']
    #allocation9 [shape = 'u8[32768]{0}', space=vmem, size = 0x8000, scoped, tag = 'input window, operand 5, single buffered']
    #allocation10 [shape = 's32[1]{0}', space=sflag, size = 0x4, scoped, tag = 'scoped memory for tpu_custom_call.1']
    #allocation11 [shape = 'u8[32768]{0}', space=vmem, size = 0x8000, scoped, tag = 'input window, operand 7, single buffered']
    #allocation12 [shape = 'u8[4096]{0}', space=vmem, size = 0x1000, scoped, tag = 'output window, operand 0, single buffered']
    #allocation13 [shape = 'u8[4096]{0}', space=vmem, size = 0x1000, scoped, tag = 'output window, operand 1, single buffered']
    #allocation14 [shape = 's32[1]{0}', space=sflag, size = 0x4, scoped, tag = 'scoped memory for tpu_custom_call.1']
    %15 = vsyncpa [#allocation4], 0
    %16 = vsyncpa [#allocation7], 0
    %17 = vsyncpa [#allocation10], 0
    %18 = vsyncpa [#allocation5], 0
    %19 = vsyncpa [#allocation14], 0
    // Predicated region
    $region2: #{tpu_custom_call.1} parent=1 // pred_check
      _
    $region3: #{tpu_custom_call.1} parent=1 // pred_check_branch
      %21 = sbr.rel (0) target = $region5
    $region4: #{tpu_custom_call.1} parent=1 // pred_region
      %s23 = ssub.s32 128, 128
      %24 = vsyncadd [#allocation4], %s23
      %s26 = sshll.u32 [#allocation3], 4
      %s27 = int_to_ptr.vmem [resolvable:$true] %s26
      %29 = dma.hbm_to_vmem [thread:$0]  %s0, 128, %s27, [#allocation4]
    $region5: #{tpu_custom_call.1} parent=1 // pred_fallthru
      _
    // Predicated region
    $region6: #{tpu_custom_call.1} parent=1 // pred_check
      _
    $region7: #{tpu_custom_call.1} parent=1 // pred_check_branch
      %31 = sbr.rel (0) target = $region9
    $region8: #{tpu_custom_call.1} parent=1 // pred_region
      %s33 = ssub.s32 1024, 1024
      %34 = vsyncadd [#allocation7], %s33
      %s35 = sshll.u32 [#allocation6], 4
      %s36 = int_to_ptr.vmem [resolvable:$true] %s35
      %41 = dma.hbm_to_vmem [thread:$0]  %s1, 1024, %s36, [#allocation7], 64, 64, 4
    $region9: #{tpu_custom_call.1} parent=1 // pred_fallthru
      _
    // Predicated region
    $region10: #{tpu_custom_call.1} parent=1 // pred_check
      _
    $region11: #{tpu_custom_call.1} parent=1 // pred_check_branch
      %43 = sbr.rel (0) target = $region13
    $region12: #{tpu_custom_call.1} parent=1 // pred_region
      _
    $region13: #{tpu_custom_call.1} parent=1 // pred_fallthru
      _
    // Predicated region
    $region14: #{tpu_custom_call.1} parent=1 // pred_check
      _
    $region15: #{tpu_custom_call.1} parent=1 // pred_check_branch
      %45 = sbr.rel (0) target = $region17
    $region16: #{tpu_custom_call.1} parent=1 // pred_region
      %s47 = ssub.s32 1024, 1024
      %48 = vsyncadd [#allocation7], %s47
      %s49 = sshll.u32 [#allocation8], 4
      %s50 = int_to_ptr.vmem [resolvable:$true] %s49
      %55 = dma.hbm_to_vmem [thread:$0]  %s3, 1024, %s50, [#allocation7], 64, 64, 4
    $region17: #{tpu_custom_call.1} parent=1 // pred_fallthru
      _
    // Predicated region
    $region18: #{tpu_custom_call.1} parent=1 // pred_check
      _
    $region19: #{tpu_custom_call.1} parent=1 // pred_check_branch
      %57 = sbr.rel (0) target = $region21
    $region20: #{tpu_custom_call.1} parent=1 // pred_region
      _
    $region21: #{tpu_custom_call.1} parent=1 // pred_fallthru
      _
    // Predicated region
    $region22: #{tpu_custom_call.1} parent=1 // pred_check
      _
    $region23: #{tpu_custom_call.1} parent=1 // pred_check_branch
      %59 = sbr.rel (0) target = $region25
    $region24: #{tpu_custom_call.1} parent=1 // pred_region
      %s61 = ssub.s32 1024, 1024
      %62 = vsyncadd [#allocation10], %s61
      %s63 = sshll.u32 [#allocation9], 4
      %s64 = int_to_ptr.vmem [resolvable:$true] %s63
      %69 = dma.hbm_to_vmem [thread:$0]  %s5, 1024, %s64, [#allocation10], 64, 64, 4
    $region25: #{tpu_custom_call.1} parent=1 // pred_fallthru
      _
    // Predicated region
    $region26: #{tpu_custom_call.1} parent=1 // pred_check
      _
    $region27: #{tpu_custom_call.1} parent=1 // pred_check_branch
      %71 = sbr.rel (0) target = $region29
    $region28: #{tpu_custom_call.1} parent=1 // pred_region
      _
    $region29: #{tpu_custom_call.1} parent=1 // pred_fallthru
      _
    // Predicated region
    $region30: #{tpu_custom_call.1} parent=1 // pred_check
      _
    $region31: #{tpu_custom_call.1} parent=1 // pred_check_branch
      %73 = sbr.rel (0) target = $region33
    $region32: #{tpu_custom_call.1} parent=1 // pred_region
      %s75 = ssub.s32 1024, 1024
      %76 = vsyncadd [#allocation10], %s75
      %s77 = sshll.u32 [#allocation11], 4
      %s78 = int_to_ptr.vmem [resolvable:$true] %s77
      %83 = dma.hbm_to_vmem [thread:$0]  %s7, 1024, %s78, [#allocation10], 64, 64, 4
    $region33: #{tpu_custom_call.1} parent=1 // pred_fallthru
      _
    // Predicated region
    $region34: #{tpu_custom_call.1} parent=1 // pred_check
      _
    $region35: #{tpu_custom_call.1} parent=1 // pred_check_branch
      %85 = sbr.rel (0) target = $region37
    $region36: #{tpu_custom_call.1} parent=1 // pred_region
      %86 = dma.done [#allocation4], 128
    $region37: #{tpu_custom_call.1} parent=1 // pred_fallthru
      _
    // Predicated region
    $region38: #{tpu_custom_call.1} parent=1 // pred_check
      _
    $region39: #{tpu_custom_call.1} parent=1 // pred_check_branch
      %88 = sbr.rel (0) target = $region41
    $region40: #{tpu_custom_call.1} parent=1 // pred_region
      %89 = dma.done [#allocation7], 1024
    $region41: #{tpu_custom_call.1} parent=1 // pred_fallthru
      _
    // Predicated region
    $region42: #{tpu_custom_call.1} parent=1 // pred_check
      _
    $region43: #{tpu_custom_call.1} parent=1 // pred_check_branch
      %91 = sbr.rel (0) target = $region45
    $region44: #{tpu_custom_call.1} parent=1 // pred_region
      %92 = dma.done [#allocation7], 1024
    $region45: #{tpu_custom_call.1} parent=1 // pred_fallthru
      _
    // Predicated region
    $region46: #{tpu_custom_call.1} parent=1 // pred_check
      _
    $region47: #{tpu_custom_call.1} parent=1 // pred_check_branch
      %94 = sbr.rel (0) target = $region49
    $region48: #{tpu_custom_call.1} parent=1 // pred_region
      %95 = dma.done [#allocation10], 1024
    $region49: #{tpu_custom_call.1} parent=1 // pred_fallthru
      _
    // Predicated region
    $region50: #{tpu_custom_call.1} parent=1 // pred_check
      _
    $region51: #{tpu_custom_call.1} parent=1 // pred_check_branch
      %97 = sbr.rel (0) target = $region53
    $region52: #{tpu_custom_call.1} parent=1 // pred_region
      %98 = dma.done [#allocation10], 1024
    $region53: #{tpu_custom_call.1} parent=1 // pred_fallthru
      _
    %p100 = scmp.eq.s32.totalorder 0, 0
    // Predicated region
    $region54: #{tpu_custom_call.1} parent=1 // pred_check
      %p101 = pneg %p100
    $region55: #{tpu_custom_call.1} parent=1 // pred_check_branch
      %103 = sbr.rel (%p101) target = $region57
    $region56: #{tpu_custom_call.1} parent=1 // pred_region
      %v104 = vld [vmem:[#allocation3] sm:$0xff]
      %v105 = vpack.c.bf16 %v104, %v104
      %v106 = vld [vmem:[#allocation6] sm:$0xf]
      %v107 = vld [vmem:[#allocation6 + $0x4] sm:$0xf]
      %v108 = vld [vmem:[#allocation6 + $0x8] sm:$0xf]
      %v109 = vld [vmem:[#allocation6 + $0xc] sm:$0xf]
      %v110 = vld [vmem:[#allocation6 + $0x10] sm:$0xf]
      %v111 = vld [vmem:[#allocation6 + $0x14] sm:$0xf]
      %v112 = vld [vmem:[#allocation6 + $0x18] sm:$0xf]
      %v113 = vld [vmem:[#allocation6 + $0x1c] sm:$0xf]
      %v114 = vld [vmem:[#allocation6 + $0x20] sm:$0xf]
      %v115 = vld [vmem:[#allocation6 + $0x24] sm:$0xf]
      %v116 = vld [vmem:[#allocation6 + $0x28] sm:$0xf]
      %v117 = vld [vmem:[#allocation6 + $0x2c] sm:$0xf]
      %v118 = vld [vmem:[#allocation6 + $0x30] sm:$0xf]
      %v119 = vld [vmem:[#allocation6 + $0x34] sm:$0xf]
      %v120 = vld [vmem:[#allocation6 + $0x38] sm:$0xf]
      %v121 = vld [vmem:[#allocation6 + $0x3c] sm:$0xf]
      %v122 = vld [vmem:[%s2] sm:$0x1]
      %v124 = vlaneseq
      %v125 = vshrl.u32 %v124, 7
      %v126 = vsub.s32 0, %v125
      %v127 = vrot.slane %v122, %v126
      %v145 = vunpack.c.l.b16 %v106
      %v146 = vunpack.c.l.b16 %v107
      %v147 = vunpack.c.l.b16 %v108
      %v148 = vunpack.c.l.b16 %v109
      %v149 = vunpack.c.l.b16 %v110
      %v150 = vunpack.c.l.b16 %v111
      %v151 = vunpack.c.l.b16 %v112
      %v152 = vunpack.c.l.b16 %v113
      %v153 = vunpack.c.l.b16 %v114
      %v154 = vunpack.c.l.b16 %v115
      %v155 = vunpack.c.l.b16 %v116
      %v156 = vunpack.c.l.b16 %v117
      %v157 = vunpack.c.l.b16 %v118
      %v158 = vunpack.c.l.b16 %v119
      %v159 = vunpack.c.l.b16 %v120
      %v160 = vunpack.c.l.b16 %v121
      %v161 = vpack.c.b16 %v146, %v145
      %v162 = vpack.c.b16 %v148, %v147
      %v163 = vpack.c.b16 %v150, %v149
      %v164 = vpack.c.b16 %v152, %v151
      %v165 = vpack.c.b16 %v154, %v153
      %v166 = vpack.c.b16 %v156, %v155
      %v167 = vpack.c.b16 %v158, %v157
      %v168 = vpack.c.b16 %v160, %v159
      %177 = vmatprep.subr.bf16.mxu0 0
      %178 = vmatpush1.bf16.msra.mxu0 %v161
      %179 = vmatprep.subr.bf16.mxu0 0
      %180 = vmatpush1.bf16.msra.mxu0 %v162
      %181 = vmatprep.subr.bf16.mxu0 0
      %182 = vmatpush1.bf16.msra.mxu0 %v163
      %183 = vmatprep.subr.bf16.mxu0 0
      %184 = vmatpush1.bf16.msra.mxu0 %v164
      %185 = vmatprep.subr.bf16.mxu0 0
      %186 = vmatpush1.bf16.msra.mxu0 %v165
      %187 = vmatprep.subr.bf16.mxu0 0
      %188 = vmatpush1.bf16.msra.mxu0 %v166
      %189 = vmatprep.subr.bf16.mxu0 0
      %190 = vmatpush1.bf16.msra.mxu0 %v167
      %191 = vmatprep.subr.bf16.mxu0 0
      %192 = vmatpush1.bf16.msra.mxu0 %v168
      %193 = vmatprep.subr.bf16.mxu0 0
      %194 = vmatpush1.bf16.msra.mxu0 0
      %195 = vmatprep.subr.bf16.mxu0 0
      %196 = vmatpush1.bf16.msra.mxu0 0
      %197 = vmatprep.subr.bf16.mxu0 0
      %198 = vmatpush1.bf16.msra.mxu0 0
      %199 = vmatprep.subr.bf16.mxu0 0
      %200 = vmatpush1.bf16.msra.mxu0 0
      %201 = vmatprep.subr.bf16.mxu0 0
      %202 = vmatpush1.bf16.msra.mxu0 0
      %203 = vmatprep.subr.bf16.mxu0 0
      %204 = vmatpush1.bf16.msra.mxu0 0
      %205 = vmatprep.subr.bf16.mxu0 0
      %206 = vmatpush1.bf16.msra.mxu0 0
      %207 = vmatprep.subr.bf16.mxu0 0
      %208 = vmatpush1.bf16.msra.mxu0 0
      %209 = vmatprep.mubr.bf16.mxu0 0
      %210 = vmatmul.mubr.bf16.gmra.mrb[0].mxu0 %v105
      %v211 = vpop.f32.mrb[0].mxu0
      %v212 = vadd.f32 %v127, %v211
      %v213 = vpop.f32.mrb[0].mxu0
      %v214 = vpop.f32.mrb[0].mxu0
      %v215 = vpop.f32.mrb[0].mxu0
      %216 = vdwg.mxu0
      %v217 = vmul.f32 %v212, 0.5
      %v218 = vmul.f32 %v212, 0.70710677
      %v219 = verf.f32.pop %v218
      %v220 = vadd.f32 %v219, 1.0
      %v221 = vmul.f32 %v217, %v220
      %v222 = vpack.c.bf16 %v221, %v221
      %v223 = vld [vmem:[#allocation8] sm:$0xf]
      %v224 = vld [vmem:[#allocation8 + $0x4] sm:$0xf]
      %v225 = vld [vmem:[#allocation8 + $0x8] sm:$0xf]
      %v226 = vld [vmem:[#allocation8 + $0xc] sm:$0xf]
      %v227 = vld [vmem:[#allocation8 + $0x10] sm:$0xf]
      %v228 = vld [vmem:[#allocation8 + $0x14] sm:$0xf]
      %v229 = vld [vmem:[#allocation8 + $0x18] sm:$0xf]
      %v230 = vld [vmem:[#allocation8 + $0x1c] sm:$0xf]
      %v231 = vld [vmem:[#allocation8 + $0x20] sm:$0xf]
      %v232 = vld [vmem:[#allocation8 + $0x24] sm:$0xf]
      %v233 = vld [vmem:[#allocation8 + $0x28] sm:$0xf]
      %v234 = vld [vmem:[#allocation8 + $0x2c] sm:$0xf]
      %v235 = vld [vmem:[#allocation8 + $0x30] sm:$0xf]
      %v236 = vld [vmem:[#allocation8 + $0x34] sm:$0xf]
      %v237 = vld [vmem:[#allocation8 + $0x38] sm:$0xf]
      %v238 = vld [vmem:[#allocation8 + $0x3c] sm:$0xf]
      %v239 = vld [vmem:[%s4] sm:$0x1]
      %v241 = vlaneseq
      %v242 = vshrl.u32 %v241, 7
      %v243 = vsub.s32 0, %v242
      %v244 = vrot.slane %v239, %v243
      %v262 = vunpack.c.l.b16 %v223
      %v263 = vunpack.c.l.b16 %v224
      %v264 = vunpack.c.l.b16 %v225
      %v265 = vunpack.c.l.b16 %v226
      %v266 = vunpack.c.l.b16 %v227
      %v267 = vunpack.c.l.b16 %v228
      %v268 = vunpack.c.l.b16 %v229
      %v269 = vunpack.c.l.b16 %v230
      %v270 = vunpack.c.l.b16 %v231
      %v271 = vunpack.c.l.b16 %v232
      %v272 = vunpack.c.l.b16 %v233
      %v273 = vunpack.c.l.b16 %v234
      %v274 = vunpack.c.l.b16 %v235
      %v275 = vunpack.c.l.b16 %v236
      %v276 = vunpack.c.l.b16 %v237
      %v277 = vunpack.c.l.b16 %v238
      %v278 = vpack.c.b16 %v263, %v262
      %v279 = vpack.c.b16 %v265, %v264
      %v280 = vpack.c.b16 %v267, %v266
      %v281 = vpack.c.b16 %v269, %v268
      %v282 = vpack.c.b16 %v271, %v270
      %v283 = vpack.c.b16 %v273, %v272
      %v284 = vpack.c.b16 %v275, %v274
      %v285 = vpack.c.b16 %v277, %v276
      %294 = vmatprep.subr.bf16.mxu0 0
      %295 = vmatpush1.bf16.msra.mxu0 %v278
      %296 = vmatprep.subr.bf16.mxu0 0
      %297 = vmatpush1.bf16.msra.mxu0 %v279
      %298 = vmatprep.subr.bf16.mxu0 0
      %299 = vmatpush1.bf16.msra.mxu0 %v280
      %300 = vmatprep.subr.bf16.mxu0 0
      %301 = vmatpush1.bf16.msra.mxu0 %v281
      %302 = vmatprep.subr.bf16.mxu0 0
      %303 = vmatpush1.bf16.msra.mxu0 %v282
      %304 = vmatprep.subr.bf16.mxu0 0
      %305 = vmatpush1.bf16.msra.mxu0 %v283
      %306 = vmatprep.subr.bf16.mxu0 0
      %307 = vmatpush1.bf16.msra.mxu0 %v284
      %308 = vmatprep.subr.bf16.mxu0 0
      %309 = vmatpush1.bf16.msra.mxu0 %v285
      %310 = vmatprep.subr.bf16.mxu0 0
      %311 = vmatpush1.bf16.msra.mxu0 0
      %312 = vmatprep.subr.bf16.mxu0 0
      %313 = vmatpush1.bf16.msra.mxu0 0
      %314 = vmatprep.subr.bf16.mxu0 0
      %315 = vmatpush1.bf16.msra.mxu0 0
      %316 = vmatprep.subr.bf16.mxu0 0
      %317 = vmatpush1.bf16.msra.mxu0 0
      %318 = vmatprep.subr.bf16.mxu0 0
      %319 = vmatpush1.bf16.msra.mxu0 0
      %320 = vmatprep.subr.bf16.mxu0 0
      %321 = vmatpush1.bf16.msra.mxu0 0
      %322 = vmatprep.subr.bf16.mxu0 0
      %323 = vmatpush1.bf16.msra.mxu0 0
      %324 = vmatprep.subr.bf16.mxu0 0
      %325 = vmatpush1.bf16.msra.mxu0 0
      %326 = vmatprep.mubr.bf16.mxu0 0
      %327 = vmatmul.mubr.bf16.gmra.mrb[0].mxu0 %v222
      %v328 = vpop.f32.mrb[0].mxu0
      %v329 = vadd.f32 %v244, %v328
      %v330 = vpop.f32.mrb[0].mxu0
      %v331 = vpop.f32.mrb[0].mxu0
      %v332 = vpop.f32.mrb[0].mxu0
      %333 = vdwg.mxu0
      %v334 = vmul.f32 %v329, 0.5
      %v335 = vmul.f32 %v329, 0.70710677
      %v336 = verf.f32.pop %v335
      %v337 = vadd.f32 %v336, 1.0
      %v338 = vmul.f32 %v334, %v337
      %v339 = vpack.c.bf16 %v338, %v338
      %v340 = vld [vmem:[#allocation9] sm:$0xf]
      %v341 = vld [vmem:[#allocation9 + $0x4] sm:$0xf]
      %v342 = vld [vmem:[#allocation9 + $0x8] sm:$0xf]
      %v343 = vld [vmem:[#allocation9 + $0xc] sm:$0xf]
      %v344 = vld [vmem:[#allocation9 + $0x10] sm:$0xf]
      %v345 = vld [vmem:[#allocation9 + $0x14] sm:$0xf]
      %v346 = vld [vmem:[#allocation9 + $0x18] sm:$0xf]
      %v347 = vld [vmem:[#allocation9 + $0x1c] sm:$0xf]
      %v348 = vld [vmem:[#allocation9 + $0x20] sm:$0xf]
      %v349 = vld [vmem:[#allocation9 + $0x24] sm:$0xf]
      %v350 = vld [vmem:[#allocation9 + $0x28] sm:$0xf]
      %v351 = vld [vmem:[#allocation9 + $0x2c] sm:$0xf]
      %v352 = vld [vmem:[#allocation9 + $0x30] sm:$0xf]
      %v353 = vld [vmem:[#allocation9 + $0x34] sm:$0xf]
      %v354 = vld [vmem:[#allocation9 + $0x38] sm:$0xf]
      %v355 = vld [vmem:[#allocation9 + $0x3c] sm:$0xf]
      %v356 = vld [vmem:[%s6] sm:$0x1]
      %v358 = vlaneseq
      %v359 = vshrl.u32 %v358, 7
      %v360 = vsub.s32 0, %v359
      %v361 = vrot.slane %v356, %v360
      %v379 = vunpack.c.l.b16 %v340
      %v380 = vunpack.c.l.b16 %v341
      %v381 = vunpack.c.l.b16 %v342
      %v382 = vunpack.c.l.b16 %v343
      %v383 = vunpack.c.l.b16 %v344
      %v384 = vunpack.c.l.b16 %v345
      %v385 = vunpack.c.l.b16 %v346
      %v386 = vunpack.c.l.b16 %v347
      %v387 = vunpack.c.l.b16 %v348
      %v388 = vunpack.c.l.b16 %v349
      %v389 = vunpack.c.l.b16 %v350
      %v390 = vunpack.c.l.b16 %v351
      %v391 = vunpack.c.l.b16 %v352
      %v392 = vunpack.c.l.b16 %v353
      %v393 = vunpack.c.l.b16 %v354
      %v394 = vunpack.c.l.b16 %v355
      %v395 = vpack.c.b16 %v380, %v379
      %v396 = vpack.c.b16 %v382, %v381
      %v397 = vpack.c.b16 %v384, %v383
      %v398 = vpack.c.b16 %v386, %v385
      %v399 = vpack.c.b16 %v388, %v387
      %v400 = vpack.c.b16 %v390, %v389
      %v401 = vpack.c.b16 %v392, %v391
      %v402 = vpack.c.b16 %v394, %v393
      %411 = vmatprep.subr.bf16.mxu0 0
      %412 = vmatpush1.bf16.msra.mxu0 %v395
      %413 = vmatprep.subr.bf16.mxu0 0
      %414 = vmatpush1.bf16.msra.mxu0 %v396
      %415 = vmatprep.subr.bf16.mxu0 0
      %416 = vmatpush1.bf16.msra.mxu0 %v397
      %417 = vmatprep.subr.bf16.mxu0 0
      %418 = vmatpush1.bf16.msra.mxu0 %v398
      %419 = vmatprep.subr.bf16.mxu0 0
      %420 = vmatpush1.bf16.msra.mxu0 %v399
      %421 = vmatprep.subr.bf16.mxu0 0
      %422 = vmatpush1.bf16.msra.mxu0 %v400
      %423 = vmatprep.subr.bf16.mxu0 0
      %424 = vmatpush1.bf16.msra.mxu0 %v401
      %425 = vmatprep.subr.bf16.mxu0 0
      %426 = vmatpush1.bf16.msra.mxu0 %v402
      %427 = vmatprep.subr.bf16.mxu0 0
      %428 = vmatpush1.bf16.msra.mxu0 0
      %429 = vmatprep.subr.bf16.mxu0 0
      %430 = vmatpush1.bf16.msra.mxu0 0
      %431 = vmatprep.subr.bf16.mxu0 0
      %432 = vmatpush1.bf16.msra.mxu0 0
      %433 = vmatprep.subr.bf16.mxu0 0
      %434 = vmatpush1.bf16.msra.mxu0 0
      %435 = vmatprep.subr.bf16.mxu0 0
      %436 = vmatpush1.bf16.msra.mxu0 0
      %437 = vmatprep.subr.bf16.mxu0 0
      %438 = vmatpush1.bf16.msra.mxu0 0
      %439 = vmatprep.subr.bf16.mxu0 0
      %440 = vmatpush1.bf16.msra.mxu0 0
      %441 = vmatprep.subr.bf16.mxu0 0
      %442 = vmatpush1.bf16.msra.mxu0 0
      %443 = vmatprep.mubr.bf16.mxu0 0
      %444 = vmatmul.mubr.bf16.gmra.mrb[0].mxu0 %v339
      %v445 = vpop.f32.mrb[0].mxu0
      %v446 = vadd.f32 %v361, %v445
      %v447 = vpop.f32.mrb[0].mxu0
      %v448 = vpop.f32.mrb[0].mxu0
      %v449 = vpop.f32.mrb[0].mxu0
      %450 = vdwg.mxu0
      %451 = vst [vmem:[#allocation12] sm:$0xff] %v446
      %v452 = vmul.f32 %v104, %v104
      %453 = vadd.xlane.f32.xlu0 %v452
      %v454 = vpop.xlane.xlu0 %453
      %v455 = vmax.f32 %v454, 1e-24
      %v456 = vrsqrt.pop %v455
      %v457 = vmul.f32 %v104, %v456
      %v458 = vpack.c.bf16 %v457, %v457
      %459 = vst [vmem:[#allocation2] sm:$0xf] %v458
    $region57: #{tpu_custom_call.1} parent=1 // pred_fallthru
      _
    %v460 = vld [vmem:[#allocation2] sm:$0xf]
    %v461 = vld [vmem:[#allocation11] sm:$0xf]
    %v462 = vld [vmem:[#allocation11 + $0x4] sm:$0xf]
    %v463 = vld [vmem:[#allocation11 + $0x8] sm:$0xf]
    %v464 = vld [vmem:[#allocation11 + $0xc] sm:$0xf]
    %v465 = vld [vmem:[#allocation11 + $0x10] sm:$0xf]
    %v466 = vld [vmem:[#allocation11 + $0x14] sm:$0xf]
    %v467 = vld [vmem:[#allocation11 + $0x18] sm:$0xf]
    %v468 = vld [vmem:[#allocation11 + $0x1c] sm:$0xf]
    %v469 = vld [vmem:[#allocation11 + $0x20] sm:$0xf]
    %v470 = vld [vmem:[#allocation11 + $0x24] sm:$0xf]
    %v471 = vld [vmem:[#allocation11 + $0x28] sm:$0xf]
    %v472 = vld [vmem:[#allocation11 + $0x2c] sm:$0xf]
    %v473 = vld [vmem:[#allocation11 + $0x30] sm:$0xf]
    %v474 = vld [vmem:[#allocation11 + $0x34] sm:$0xf]
    %v475 = vld [vmem:[#allocation11 + $0x38] sm:$0xf]
    %v476 = vld [vmem:[#allocation11 + $0x3c] sm:$0xf]
    %v493 = vunpack.c.l.b16 %v461
    %v494 = vunpack.c.l.b16 %v462
    %v495 = vunpack.c.l.b16 %v463
    %v496 = vunpack.c.l.b16 %v464
    %v497 = vunpack.c.l.b16 %v465
    %v498 = vunpack.c.l.b16 %v466
    %v499 = vunpack.c.l.b16 %v467
    %v500 = vunpack.c.l.b16 %v468
    %v501 = vunpack.c.l.b16 %v469
    %v502 = vunpack.c.l.b16 %v470
    %v503 = vunpack.c.l.b16 %v471
    %v504 = vunpack.c.l.b16 %v472
    %v505 = vunpack.c.l.b16 %v473
    %v506 = vunpack.c.l.b16 %v474
    %v507 = vunpack.c.l.b16 %v475
    %v508 = vunpack.c.l.b16 %v476
    %v509 = vpack.c.b16 %v494, %v493
    %v510 = vpack.c.b16 %v496, %v495
    %v511 = vpack.c.b16 %v498, %v497
    %v512 = vpack.c.b16 %v500, %v499
    %v513 = vpack.c.b16 %v502, %v501
    %v514 = vpack.c.b16 %v504, %v503
    %v515 = vpack.c.b16 %v506, %v505
    %v516 = vpack.c.b16 %v508, %v507
    %525 = vmatprep.subr.bf16.mxu0 0
    %526 = vmatpush1.bf16.msra.mxu0 %v509
    %527 = vmatprep.subr.bf16.mxu0 0
    %528 = vmatpush1.bf16.msra.mxu0 %v510
    %529 = vmatprep.subr.bf16.mxu0 0
    %530 = vmatpush1.bf16.msra.mxu0 %v511
    %531 = vmatprep.subr.bf16.mxu0 0
    %532 = vmatpush1.bf16.msra.mxu0 %v512
    %533 = vmatprep.subr.bf16.mxu0 0
    %534 = vmatpush1.bf16.msra.mxu0 %v513
    %535 = vmatprep.subr.bf16.mxu0 0
    %536 = vmatpush1.bf16.msra.mxu0 %v514
    %537 = vmatprep.subr.bf16.mxu0 0
    %538 = vmatpush1.bf16.msra.mxu0 %v515
    %539 = vmatprep.subr.bf16.mxu0 0
    %540 = vmatpush1.bf16.msra.mxu0 %v516
    %541 = vmatprep.subr.bf16.mxu0 0
    %542 = vmatpush1.bf16.msra.mxu0 0
    %543 = vmatprep.subr.bf16.mxu0 0
    %544 = vmatpush1.bf16.msra.mxu0 0
    %545 = vmatprep.subr.bf16.mxu0 0
    %546 = vmatpush1.bf16.msra.mxu0 0
    %547 = vmatprep.subr.bf16.mxu0 0
    %548 = vmatpush1.bf16.msra.mxu0 0
    %549 = vmatprep.subr.bf16.mxu0 0
    %550 = vmatpush1.bf16.msra.mxu0 0
    %551 = vmatprep.subr.bf16.mxu0 0
    %552 = vmatpush1.bf16.msra.mxu0 0
    %553 = vmatprep.subr.bf16.mxu0 0
    %554 = vmatpush1.bf16.msra.mxu0 0
    %555 = vmatprep.subr.bf16.mxu0 0
    %556 = vmatpush1.bf16.msra.mxu0 0
    %557 = vmatprep.mubr.bf16.mxu0 0
    %558 = vmatmul.mubr.bf16.gmra.mrb[0].mxu0 %v460
    %v559 = vpop.f32.mrb[0].mxu0
    %v560 = vadd.f32 0.0, %v559
    %v561 = vpop.f32.mrb[0].mxu0
    %v562 = vpop.f32.mrb[0].mxu0
    %v563 = vpop.f32.mrb[0].mxu0
    %564 = vdwg.mxu0
    %565 = vst [vmem:[#allocation13] sm:$0xff] %v560
    // Predicated region
    $region58: #{tpu_custom_call.1} parent=1 // pred_check
      _
    $region59: #{tpu_custom_call.1} parent=1 // pred_check_branch
      %567 = sbr.rel (0) target = $region61
    $region60: #{tpu_custom_call.1} parent=1 // pred_region
      %s569 = ssub.s32 128, 128
      %570 = vsyncadd [#allocation5], %s569
      %s572 = sshll.u32 [#allocation12], 4
      %s573 = int_to_ptr.vmem [resolvable:$true] %s572
      %575 = dma.vmem_to_hbm [thread:$0]  %s573, 128, %s8, [#allocation5]
    $region61: #{tpu_custom_call.1} parent=1 // pred_fallthru
      _
    // Predicated region
    $region62: #{tpu_custom_call.1} parent=1 // pred_check
      _
    $region63: #{tpu_custom_call.1} parent=1 // pred_check_branch
      %577 = sbr.rel (0) target = $region65
    $region64: #{tpu_custom_call.1} parent=1 // pred_region
      %s579 = ssub.s32 128, 128
      %580 = vsyncadd [#allocation14], %s579
      %s582 = sshll.u32 [#allocation13], 4
      %s583 = int_to_ptr.vmem [resolvable:$true] %s582
      %585 = dma.vmem_to_hbm [thread:$0]  %s583, 128, %s9, [#allocation14]
    $region65: #{tpu_custom_call.1} parent=1 // pred_fallthru
      _
    // Predicated region
    $region66: #{tpu_custom_call.1} parent=1 // pred_check
      _
    $region67: #{tpu_custom_call.1} parent=1 // pred_check_branch
      %587 = sbr.rel (0) target = $region69
    $region68: #{tpu_custom_call.1} parent=1 // pred_region
      %588 = dma.done [#allocation5], 128
    $region69: #{tpu_custom_call.1} parent=1 // pred_fallthru
      _
    // Predicated region
    $region70: #{tpu_custom_call.1} parent=1 // pred_check
      _
    $region71: #{tpu_custom_call.1} parent=1 // pred_check_branch
      %590 = sbr.rel (0) target = $region73
    $region72: #{tpu_custom_call.1} parent=1 // pred_region
      %591 = dma.done [#allocation14], 128
    $region73: #{tpu_custom_call.1} parent=1 // pred_fallthru
      _
    %592 = vsyncpa [#allocation4], 1
    %593 = vsyncpa [#allocation7], 1
    %594 = vsyncpa [#allocation10], 1
    %595 = vsyncpa [#allocation5], 1
    %596 = vsyncpa [#allocation14], 1

// kernel: tpu_custom_call.1
$region0: #{tpu_custom_call.1}
  #allocation0 [shape = 'u32[]', space=smem, size = 0x4, offset = 0x4, fixed_abs, tag = 'smem constant byte address 0x4 - core index']
  #allocation1 [shape = 'u32[144,128]{1,0:T(1,128)}', space=vmem, size = 0x12000, scoped, tag = 'internal scratch']
  #allocation2 [shape = 'bf16[8,128]{1,0:T(8,128)(2,1)}', space=vmem, size = 0x800, scoped, tag = 'scratch operand']
  %s0 = inlined_call_operand.hbm [shape: f32[8,128], index: 0, kind: input, shape index: {}]
  %s1 = inlined_call_operand.hbm [shape: bf16[128,128], index: 1, kind: input, shape index: {}]
  %s2 = inlined_call_operand.vmem [shape: f32[1,128], index: 2, kind: input, shape index: {}]
  %s3 = inlined_call_operand.hbm [shape: bf16[128,128], index: 3, kind: input, shape index: {}]
  %s4 = inlined_call_operand.vmem [shape: f32[1,128], index: 4, kind: input, shape index: {}]
  %s5 = inlined_call_operand.hbm [shape: bf16[128,128], index: 5, kind: input, shape index: {}]
  %s6 = inlined_call_operand.vmem [shape: f32[1,128], index: 6, kind: input, shape index: {}]
  %s7 = inlined_call_operand.hbm [shape: bf16[128,128], index: 7, kind: input, shape index: {}]
  %s8 = inlined_call_operand.hbm [shape: f32[8,128], index: 8, kind: output, shape index: {0}]
  %s9 = inlined_call_operand.hbm [shape: f32[8,128], index: 9, kind: output, shape index: {1}]
  %10 = xla_tuple %s8, %s9
  %s11 = sld [smem:[#allocation0]]
  $region74: #{tpu_custom_call.1} parent=0
    _
  %s13 = ssub.s32 1, %s11
  %s14 = scalar_select 0, %s13, %s11
  $region1: #{tpu_custom_call.1} parent=0
    #allocation3 [shape = 'u8[4096]{0}', space=vmem, size = 0x1000, scoped, tag = 'input window, operand 0, single buffered']
    #allocation4 [shape = 's32[1]{0}', space=sflag, size = 0x4, scoped, tag = 'scoped memory for tpu_custom_call.1']
    #allocation5 [shape = 's32[1]{0}', space=sflag, size = 0x4, scoped, tag = 'scoped memory for tpu_custom_call.1']
    #allocation6 [shape = 'u8[32768]{0}', space=vmem, size = 0x8000, scoped, tag = 'input window, operand 1, single buffered']
    #allocation7 [shape = 's32[1]{0}', space=sflag, size = 0x4, scoped, tag = 'scoped memory for tpu_custom_call.1']
    #allocation8 [shape = 'u8[32768]{0}', space=vmem, size = 0x8000, scoped, tag = 'input window, operand 3, single buffered']
    #allocation9 [shape = 'u8[32768]{0}', space=vmem, size = 0x8000, scoped, tag = 'input window, operand 5, single buffered']
    #allocation10 [shape = 's32[1]{0}', space=sflag, size = 0x4, scoped, tag = 'scoped memory for tpu_custom_call.1']
    #allocation11 [shape = 'u8[32768]{0}', space=vmem, size = 0x8000, scoped, tag = 'input window, operand 7, single buffered']
    #allocation12 [shape = 'u8[4096]{0}', space=vmem, size = 0x1000, scoped, tag = 'output window, operand 0, single buffered']
    #allocation13 [shape = 'u8[4096]{0}', space=vmem, size = 0x1000, scoped, tag = 'output window, operand 1, single buffered']
    #allocation14 [shape = 's32[1]{0}', space=sflag, size = 0x4, scoped, tag = 'scoped memory for tpu_custom_call.1']
    %15 = vsyncpa [#allocation4], 0
    %16 = vsyncpa [#allocation7], 0
    %17 = vsyncpa [#allocation10], 0
    %18 = vsyncpa [#allocation5], 0
    %19 = vsyncpa [#allocation14], 0
    // Predicated region
    $region2: #{tpu_custom_call.1} parent=1 // pred_check
      _
    $region3: #{tpu_custom_call.1} parent=1 // pred_check_branch
      %21 = sbr.rel (0) target = $region5
    $region4: #{tpu_custom_call.1} parent=1 // pred_region
      %s23 = ssub.s32 128, 128
      %24 = vsyncadd [#allocation4], %s23
      %s26 = sshll.u32 [#allocation3], 4
      %s27 = int_to_ptr.vmem [resolvable:$true] %s26
      %29 = dma.hbm_to_vmem [thread:$0]  %s0, 128, %s27, [#allocation4]
    $region5: #{tpu_custom_call.1} parent=1 // pred_fallthru
      _
    // Predicated region
    $region6: #{tpu_custom_call.1} parent=1 // pred_check
      _
    $region7: #{tpu_custom_call.1} parent=1 // pred_check_branch
      %31 = sbr.rel (0) target = $region9
    $region8: #{tpu_custom_call.1} parent=1 // pred_region
      %s33 = ssub.s32 1024, 1024
      %34 = vsyncadd [#allocation7], %s33
      %s35 = sshll.u32 [#allocation6], 4
      %s36 = int_to_ptr.vmem [resolvable:$true] %s35
      %41 = dma.hbm_to_vmem [thread:$0]  %s1, 1024, %s36, [#allocation7], 64, 64, 4
    $region9: #{tpu_custom_call.1} parent=1 // pred_fallthru
      _
    // Predicated region
    $region10: #{tpu_custom_call.1} parent=1 // pred_check
      _
    $region11: #{tpu_custom_call.1} parent=1 // pred_check_branch
      %43 = sbr.rel (0) target = $region13
    $region12: #{tpu_custom_call.1} parent=1 // pred_region
      _
    $region13: #{tpu_custom_call.1} parent=1 // pred_fallthru
      _
    // Predicated region
    $region14: #{tpu_custom_call.1} parent=1 // pred_check
      _
    $region15: #{tpu_custom_call.1} parent=1 // pred_check_branch
      %45 = sbr.rel (0) target = $region17
    $region16: #{tpu_custom_call.1} parent=1 // pred_region
      %s47 = ssub.s32 1024, 1024
      %48 = vsyncadd [#allocation7], %s47
      %s49 = sshll.u32 [#allocation8], 4
      %s50 = int_to_ptr.vmem [resolvable:$true] %s49
      %55 = dma.hbm_to_vmem [thread:$0]  %s3, 1024, %s50, [#allocation7], 64, 64, 4
    $region17: #{tpu_custom_call.1} parent=1 // pred_fallthru
      _
    // Predicated region
    $region18: #{tpu_custom_call.1} parent=1 // pred_check
      _
    $region19: #{tpu_custom_call.1} parent=1 // pred_check_branch
      %57 = sbr.rel (0) target = $region21
    $region20: #{tpu_custom_call.1} parent=1 // pred_region
      _
    $region21: #{tpu_custom_call.1} parent=1 // pred_fallthru
      _
    // Predicated region
    $region22: #{tpu_custom_call.1} parent=1 // pred_check
      _
    $region23: #{tpu_custom_call.1} parent=1 // pred_check_branch
      %59 = sbr.rel (0) target = $region25
    $region24: #{tpu_custom_call.1} parent=1 // pred_region
      %s61 = ssub.s32 1024, 1024
      %62 = vsyncadd [#allocation10], %s61
      %s63 = sshll.u32 [#allocation9], 4
      %s64 = int_to_ptr.vmem [resolvable:$true] %s63
      %69 = dma.hbm_to_vmem [thread:$0]  %s5, 1024, %s64, [#allocation10], 64, 64, 4
    $region25: #{tpu_custom_call.1} parent=1 // pred_fallthru
      _
    // Predicated region
    $region26: #{tpu_custom_call.1} parent=1 // pred_check
      _
    $region27: #{tpu_custom_call.1} parent=1 // pred_check_branch
      %71 = sbr.rel (0) target = $region29
    $region28: #{tpu_custom_call.1} parent=1 // pred_region
      _
    $region29: #{tpu_custom_call.1} parent=1 // pred_fallthru
      _
    // Predicated region
    $region30: #{tpu_custom_call.1} parent=1 // pred_check
      _
    $region31: #{tpu_custom_call.1} parent=1 // pred_check_branch
      %73 = sbr.rel (0) target = $region33
    $region32: #{tpu_custom_call.1} parent=1 // pred_region
      %s75 = ssub.s32 1024, 1024
      %76 = vsyncadd [#allocation10], %s75
      %s77 = sshll.u32 [#allocation11], 4
      %s78 = int_to_ptr.vmem [resolvable:$true] %s77
      %83 = dma.hbm_to_vmem [thread:$0]  %s7, 1024, %s78, [#allocation10], 64, 64, 4
    $region33: #{tpu_custom_call.1} parent=1 // pred_fallthru
      _
    // Predicated region
    $region34: #{tpu_custom_call.1} parent=1 // pred_check
      _
    $region35: #{tpu_custom_call.1} parent=1 // pred_check_branch
      %85 = sbr.rel (0) target = $region37
    $region36: #{tpu_custom_call.1} parent=1 // pred_region
      %86 = dma.done [#allocation4], 128
    $region37: #{tpu_custom_call.1} parent=1 // pred_fallthru
      _
    // Predicated region
    $region38: #{tpu_custom_call.1} parent=1 // pred_check
      _
    $region39: #{tpu_custom_call.1} parent=1 // pred_check_branch
      %88 = sbr.rel (0) target = $region41
    $region40: #{tpu_custom_call.1} parent=1 // pred_region
      %89 = dma.done [#allocation7], 1024
    $region41: #{tpu_custom_call.1} parent=1 // pred_fallthru
      _
    // Predicated region
    $region42: #{tpu_custom_call.1} parent=1 // pred_check
      _
    $region43: #{tpu_custom_call.1} parent=1 // pred_check_branch
      %91 = sbr.rel (0) target = $region45
    $region44: #{tpu_custom_call.1} parent=1 // pred_region
      %92 = dma.done [#allocation7], 1024
    $region45: #{tpu_custom_call.1} parent=1 // pred_fallthru
      _
    // Predicated region
    $region46: #{tpu_custom_call.1} parent=1 // pred_check
      _
    $region47: #{tpu_custom_call.1} parent=1 // pred_check_branch
      %94 = sbr.rel (0) target = $region49
    $region48: #{tpu_custom_call.1} parent=1 // pred_region
      %95 = dma.done [#allocation10], 1024
    $region49: #{tpu_custom_call.1} parent=1 // pred_fallthru
      _
    // Predicated region
    $region50: #{tpu_custom_call.1} parent=1 // pred_check
      _
    $region51: #{tpu_custom_call.1} parent=1 // pred_check_branch
      %97 = sbr.rel (0) target = $region53
    $region52: #{tpu_custom_call.1} parent=1 // pred_region
      %98 = dma.done [#allocation10], 1024
    $region53: #{tpu_custom_call.1} parent=1 // pred_fallthru
      _
    %p100 = scmp.eq.s32.totalorder 0, 0
    // Predicated region
    $region54: #{tpu_custom_call.1} parent=1 // pred_check
      %p101 = pneg %p100
    $region55: #{tpu_custom_call.1} parent=1 // pred_check_branch
      %103 = sbr.rel (%p101) target = $region57
    $region56: #{tpu_custom_call.1} parent=1 // pred_region
      %v104 = vld [vmem:[#allocation3] sm:$0xff]
      %v105 = vpack.c.bf16 %v104, %v104
      %v106 = vld [vmem:[#allocation6] sm:$0xf]
      %v107 = vld [vmem:[#allocation6 + $0x4] sm:$0xf]
      %v108 = vld [vmem:[#allocation6 + $0x8] sm:$0xf]
      %v109 = vld [vmem:[#allocation6 + $0xc] sm:$0xf]
      %v110 = vld [vmem:[#allocation6 + $0x10] sm:$0xf]
      %v111 = vld [vmem:[#allocation6 + $0x14] sm:$0xf]
      %v112 = vld [vmem:[#allocation6 + $0x18] sm:$0xf]
      %v113 = vld [vmem:[#allocation6 + $0x1c] sm:$0xf]
      %v114 = vld [vmem:[#allocation6 + $0x20] sm:$0xf]
      %v115 = vld [vmem:[#allocation6 + $0x24] sm:$0xf]
      %v116 = vld [vmem:[#allocation6 + $0x28] sm:$0xf]
      %v117 = vld [vmem:[#allocation6 + $0x2c] sm:$0xf]
      %v118 = vld [vmem:[#allocation6 + $0x30] sm:$0xf]
      %v119 = vld [vmem:[#allocation6 + $0x34] sm:$0xf]
      %v120 = vld [vmem:[#allocation6 + $0x38] sm:$0xf]
      %v121 = vld [vmem:[#allocation6 + $0x3c] sm:$0xf]
      %v122 = vld [vmem:[%s2] sm:$0x1]
      %v124 = vlaneseq
      %v125 = vshrl.u32 %v124, 7
      %v126 = vsub.s32 0, %v125
      %v127 = vrot.slane %v122, %v126
      %v145 = vunpack.c.l.b16 %v106
      %v146 = vunpack.c.l.b16 %v107
      %v147 = vunpack.c.l.b16 %v108
      %v148 = vunpack.c.l.b16 %v109
      %v149 = vunpack.c.l.b16 %v110
      %v150 = vunpack.c.l.b16 %v111
      %v151 = vunpack.c.l.b16 %v112
      %v152 = vunpack.c.l.b16 %v113
      %v153 = vunpack.c.l.b16 %v114
      %v154 = vunpack.c.l.b16 %v115
      %v155 = vunpack.c.l.b16 %v116
      %v156 = vunpack.c.l.b16 %v117
      %v157 = vunpack.c.l.b16 %v118
      %v158 = vunpack.c.l.b16 %v119
      %v159 = vunpack.c.l.b16 %v120
      %v160 = vunpack.c.l.b16 %v121
      %v161 = vpack.c.b16 %v146, %v145
      %v162 = vpack.c.b16 %v148, %v147
      %v163 = vpack.c.b16 %v150, %v149
      %v164 = vpack.c.b16 %v152, %v151
      %v165 = vpack.c.b16 %v154, %v153
      %v166 = vpack.c.b16 %v156, %v155
      %v167 = vpack.c.b16 %v158, %v157
      %v168 = vpack.c.b16 %v160, %v159
      %177 = vmatprep.subr.bf16.mxu0 0
      %178 = vmatpush1.bf16.msra.mxu0 %v161
      %179 = vmatprep.subr.bf16.mxu0 0
      %180 = vmatpush1.bf16.msra.mxu0 %v162
      %181 = vmatprep.subr.bf16.mxu0 0
      %182 = vmatpush1.bf16.msra.mxu0 %v163
      %183 = vmatprep.subr.bf16.mxu0 0
      %184 = vmatpush1.bf16.msra.mxu0 %v164
      %185 = vmatprep.subr.bf16.mxu0 0
      %186 = vmatpush1.bf16.msra.mxu0 %v165
      %187 = vmatprep.subr.bf16.mxu0 0
      %188 = vmatpush1.bf16.msra.mxu0 %v166
      %189 = vmatprep.subr.bf16.mxu0 0
      %190 = vmatpush1.bf16.msra.mxu0 %v167
      %191 = vmatprep.subr.bf16.mxu0 0
      %192 = vmatpush1.bf16.msra.mxu0 %v168
      %193 = vmatprep.subr.bf16.mxu0 0
      %194 = vmatpush1.bf16.msra.mxu0 0
      %195 = vmatprep.subr.bf16.mxu0 0
      %196 = vmatpush1.bf16.msra.mxu0 0
      %197 = vmatprep.subr.bf16.mxu0 0
      %198 = vmatpush1.bf16.msra.mxu0 0
      %199 = vmatprep.subr.bf16.mxu0 0
      %200 = vmatpush1.bf16.msra.mxu0 0
      %201 = vmatprep.subr.bf16.mxu0 0
      %202 = vmatpush1.bf16.msra.mxu0 0
      %203 = vmatprep.subr.bf16.mxu0 0
      %204 = vmatpush1.bf16.msra.mxu0 0
      %205 = vmatprep.subr.bf16.mxu0 0
      %206 = vmatpush1.bf16.msra.mxu0 0
      %207 = vmatprep.subr.bf16.mxu0 0
      %208 = vmatpush1.bf16.msra.mxu0 0
      %209 = vmatprep.mubr.bf16.mxu0 0
      %210 = vmatmul.mubr.bf16.gmra.mrb[0].mxu0 %v105
      %v211 = vpop.f32.mrb[0].mxu0
      %v212 = vadd.f32 %v127, %v211
      %v213 = vpop.f32.mrb[0].mxu0
      %v214 = vpop.f32.mrb[0].mxu0
      %v215 = vpop.f32.mrb[0].mxu0
      %216 = vdwg.mxu0
      %v217 = vmul.f32 %v212, 0.5
      %v218 = vmul.f32 %v212, 0.70710677
      %v219 = verf.f32.pop %v218
      %v220 = vadd.f32 %v219, 1.0
      %v221 = vmul.f32 %v217, %v220
      %v222 = vpack.c.bf16 %v221, %v221
      %v223 = vld [vmem:[#allocation8] sm:$0xf]
      %v224 = vld [vmem:[#allocation8 + $0x4] sm:$0xf]
      %v225 = vld [vmem:[#allocation8 + $0x8] sm:$0xf]
      %v226 = vld [vmem:[#allocation8 + $0xc] sm:$0xf]
      %v227 = vld [vmem:[#allocation8 + $0x10] sm:$0xf]
      %v228 = vld [vmem:[#allocation8 + $0x14] sm:$0xf]
      %v229 = vld [vmem:[#allocation8 + $0x18] sm:$0xf]
      %v230 = vld [vmem:[#allocation8 + $0x1c] sm:$0xf]
      %v231 = vld [vmem:[#allocation8 + $0x20] sm:$0xf]
      %v232 = vld [vmem:[#allocation8 + $0x24] sm:$0xf]
      %v233 = vld [vmem:[#allocation8 + $0x28] sm:$0xf]
      %v234 = vld [vmem:[#allocation8 + $0x2c] sm:$0xf]
      %v235 = vld [vmem:[#allocation8 + $0x30] sm:$0xf]
      %v236 = vld [vmem:[#allocation8 + $0x34] sm:$0xf]
      %v237 = vld [vmem:[#allocation8 + $0x38] sm:$0xf]
      %v238 = vld [vmem:[#allocation8 + $0x3c] sm:$0xf]
      %v239 = vld [vmem:[%s4] sm:$0x1]
      %v241 = vlaneseq
      %v242 = vshrl.u32 %v241, 7
      %v243 = vsub.s32 0, %v242
      %v244 = vrot.slane %v239, %v243
      %v262 = vunpack.c.l.b16 %v223
      %v263 = vunpack.c.l.b16 %v224
      %v264 = vunpack.c.l.b16 %v225
      %v265 = vunpack.c.l.b16 %v226
      %v266 = vunpack.c.l.b16 %v227
      %v267 = vunpack.c.l.b16 %v228
      %v268 = vunpack.c.l.b16 %v229
      %v269 = vunpack.c.l.b16 %v230
      %v270 = vunpack.c.l.b16 %v231
      %v271 = vunpack.c.l.b16 %v232
      %v272 = vunpack.c.l.b16 %v233
      %v273 = vunpack.c.l.b16 %v234
      %v274 = vunpack.c.l.b16 %v235
      %v275 = vunpack.c.l.b16 %v236
      %v276 = vunpack.c.l.b16 %v237
      %v277 = vunpack.c.l.b16 %v238
      %v278 = vpack.c.b16 %v263, %v262
      %v279 = vpack.c.b16 %v265, %v264
      %v280 = vpack.c.b16 %v267, %v266
      %v281 = vpack.c.b16 %v269, %v268
      %v282 = vpack.c.b16 %v271, %v270
      %v283 = vpack.c.b16 %v273, %v272
      %v284 = vpack.c.b16 %v275, %v274
      %v285 = vpack.c.b16 %v277, %v276
      %294 = vmatprep.subr.bf16.mxu0 0
      %295 = vmatpush1.bf16.msra.mxu0 %v278
      %296 = vmatprep.subr.bf16.mxu0 0
      %297 = vmatpush1.bf16.msra.mxu0 %v279
      %298 = vmatprep.subr.bf16.mxu0 0
      %299 = vmatpush1.bf16.msra.mxu0 %v280
      %300 = vmatprep.subr.bf16.mxu0 0
      %301 = vmatpush1.bf16.msra.mxu0 %v281
      %302 = vmatprep.subr.bf16.mxu0 0
      %303 = vmatpush1.bf16.msra.mxu0 %v282
      %304 = vmatprep.subr.bf16.mxu0 0
      %305 = vmatpush1.bf16.msra.mxu0 %v283
      %306 = vmatprep.subr.bf16.mxu0 0
      %307 = vmatpush1.bf16.msra.mxu0 %v284
      %308 = vmatprep.subr.bf16.mxu0 0
      %309 = vmatpush1.bf16.msra.mxu0 %v285
      %310 = vmatprep.subr.bf16.mxu0 0
      %311 = vmatpush1.bf16.msra.mxu0 0
      %312 = vmatprep.subr.bf16.mxu0 0
      %313 = vmatpush1.bf16.msra.mxu0 0
      %314 = vmatprep.subr.bf16.mxu0 0
      %315 = vmatpush1.bf16.msra.mxu0 0
      %316 = vmatprep.subr.bf16.mxu0 0
      %317 = vmatpush1.bf16.msra.mxu0 0
      %318 = vmatprep.subr.bf16.mxu0 0
      %319 = vmatpush1.bf16.msra.mxu0 0
      %320 = vmatprep.subr.bf16.mxu0 0
      %321 = vmatpush1.bf16.msra.mxu0 0
      %322 = vmatprep.subr.bf16.mxu0 0
      %323 = vmatpush1.bf16.msra.mxu0 0
      %324 = vmatprep.subr.bf16.mxu0 0
      %325 = vmatpush1.bf16.msra.mxu0 0
      %326 = vmatprep.mubr.bf16.mxu0 0
      %327 = vmatmul.mubr.bf16.gmra.mrb[0].mxu0 %v222
      %v328 = vpop.f32.mrb[0].mxu0
      %v329 = vadd.f32 %v244, %v328
      %v330 = vpop.f32.mrb[0].mxu0
      %v331 = vpop.f32.mrb[0].mxu0
      %v332 = vpop.f32.mrb[0].mxu0
      %333 = vdwg.mxu0
      %v334 = vmul.f32 %v329, 0.5
      %v335 = vmul.f32 %v329, 0.70710677
      %v336 = verf.f32.pop %v335
      %v337 = vadd.f32 %v336, 1.0
      %v338 = vmul.f32 %v334, %v337
      %v339 = vpack.c.bf16 %v338, %v338
      %v340 = vld [vmem:[#allocation9] sm:$0xf]
      %v341 = vld [vmem:[#allocation9 + $0x4] sm:$0xf]
      %v342 = vld [vmem:[#allocation9 + $0x8] sm:$0xf]
      %v343 = vld [vmem:[#allocation9 + $0xc] sm:$0xf]
      %v344 = vld [vmem:[#allocation9 + $0x10] sm:$0xf]
      %v345 = vld [vmem:[#allocation9 + $0x14] sm:$0xf]
      %v346 = vld [vmem:[#allocation9 + $0x18] sm:$0xf]
      %v347 = vld [vmem:[#allocation9 + $0x1c] sm:$0xf]
      %v348 = vld [vmem:[#allocation9 + $0x20] sm:$0xf]
      %v349 = vld [vmem:[#allocation9 + $0x24] sm:$0xf]
      %v350 = vld [vmem:[#allocation9 + $0x28] sm:$0xf]
      %v351 = vld [vmem:[#allocation9 + $0x2c] sm:$0xf]
      %v352 = vld [vmem:[#allocation9 + $0x30] sm:$0xf]
      %v353 = vld [vmem:[#allocation9 + $0x34] sm:$0xf]
      %v354 = vld [vmem:[#allocation9 + $0x38] sm:$0xf]
      %v355 = vld [vmem:[#allocation9 + $0x3c] sm:$0xf]
      %v356 = vld [vmem:[%s6] sm:$0x1]
      %v358 = vlaneseq
      %v359 = vshrl.u32 %v358, 7
      %v360 = vsub.s32 0, %v359
      %v361 = vrot.slane %v356, %v360
      %v379 = vunpack.c.l.b16 %v340
      %v380 = vunpack.c.l.b16 %v341
      %v381 = vunpack.c.l.b16 %v342
      %v382 = vunpack.c.l.b16 %v343
      %v383 = vunpack.c.l.b16 %v344
      %v384 = vunpack.c.l.b16 %v345
      %v385 = vunpack.c.l.b16 %v346
      %v386 = vunpack.c.l.b16 %v347
      %v387 = vunpack.c.l.b16 %v348
      %v388 = vunpack.c.l.b16 %v349
      %v389 = vunpack.c.l.b16 %v350
      %v390 = vunpack.c.l.b16 %v351
      %v391 = vunpack.c.l.b16 %v352
      %v392 = vunpack.c.l.b16 %v353
      %v393 = vunpack.c.l.b16 %v354
      %v394 = vunpack.c.l.b16 %v355
      %v395 = vpack.c.b16 %v380, %v379
      %v396 = vpack.c.b16 %v382, %v381
      %v397 = vpack.c.b16 %v384, %v383
      %v398 = vpack.c.b16 %v386, %v385
      %v399 = vpack.c.b16 %v388, %v387
      %v400 = vpack.c.b16 %v390, %v389
      %v401 = vpack.c.b16 %v392, %v391
      %v402 = vpack.c.b16 %v394, %v393
      %411 = vmatprep.subr.bf16.mxu0 0
      %412 = vmatpush1.bf16.msra.mxu0 %v395
      %413 = vmatprep.subr.bf16.mxu0 0
      %414 = vmatpush1.bf16.msra.mxu0 %v396
      %415 = vmatprep.subr.bf16.mxu0 0
      %416 = vmatpush1.bf16.msra.mxu0 %v397
      %417 = vmatprep.subr.bf16.mxu0 0
      %418 = vmatpush1.bf16.msra.mxu0 %v398
      %419 = vmatprep.subr.bf16.mxu0 0
      %420 = vmatpush1.bf16.msra.mxu0 %v399
      %421 = vmatprep.subr.bf16.mxu0 0
      %422 = vmatpush1.bf16.msra.mxu0 %v400
      %423 = vmatprep.subr.bf16.mxu0 0
      %424 = vmatpush1.bf16.msra.mxu0 %v401
      %425 = vmatprep.subr.bf16.mxu0 0
      %426 = vmatpush1.bf16.msra.mxu0 %v402
      %427 = vmatprep.subr.bf16.mxu0 0
      %428 = vmatpush1.bf16.msra.mxu0 0
      %429 = vmatprep.subr.bf16.mxu0 0
      %430 = vmatpush1.bf16.msra.mxu0 0
      %431 = vmatprep.subr.bf16.mxu0 0
      %432 = vmatpush1.bf16.msra.mxu0 0
      %433 = vmatprep.subr.bf16.mxu0 0
      %434 = vmatpush1.bf16.msra.mxu0 0
      %435 = vmatprep.subr.bf16.mxu0 0
      %436 = vmatpush1.bf16.msra.mxu0 0
      %437 = vmatprep.subr.bf16.mxu0 0
      %438 = vmatpush1.bf16.msra.mxu0 0
      %439 = vmatprep.subr.bf16.mxu0 0
      %440 = vmatpush1.bf16.msra.mxu0 0
      %441 = vmatprep.subr.bf16.mxu0 0
      %442 = vmatpush1.bf16.msra.mxu0 0
      %443 = vmatprep.mubr.bf16.mxu0 0
      %444 = vmatmul.mubr.bf16.gmra.mrb[0].mxu0 %v339
      %v445 = vpop.f32.mrb[0].mxu0
      %v446 = vadd.f32 %v361, %v445
      %v447 = vpop.f32.mrb[0].mxu0
      %v448 = vpop.f32.mrb[0].mxu0
      %v449 = vpop.f32.mrb[0].mxu0
      %450 = vdwg.mxu0
      %451 = vst [vmem:[#allocation12] sm:$0xff] %v446
      %v452 = vmul.f32 %v104, %v104
      %453 = vadd.xlane.f32.xlu0 %v452
      %v454 = vpop.xlane.xlu0 %453
      %v455 = vmax.f32 %v454, 1e-24
      %v456 = vrsqrt.pop %v455
      %v457 = vmul.f32 %v104, %v456
      %v458 = vpack.c.bf16 %v457, %v457
      %459 = vst [vmem:[#allocation2] sm:$0xf] %v458
    $region57: #{tpu_custom_call.1} parent=1 // pred_fallthru
      _
    %v460 = vld [vmem:[#allocation2] sm:$0xf]
    %v461 = vld [vmem:[#allocation11] sm:$0xf]
    %v462 = vld [vmem:[#allocation11 + $0x4] sm:$0xf]
    %v463 = vld [vmem:[#allocation11 + $0x8] sm:$0xf]
    %v464 = vld [vmem:[#allocation11 + $0xc] sm:$0xf]
    %v465 = vld [vmem:[#allocation11 + $0x10] sm:$0xf]
    %v466 = vld [vmem:[#allocation11 + $0x14] sm:$0xf]
    %v467 = vld [vmem:[#allocation11 + $0x18] sm:$0xf]
    %v468 = vld [vmem:[#allocation11 + $0x1c] sm:$0xf]
    %v469 = vld [vmem:[#allocation11 + $0x20] sm:$0xf]
    %v470 = vld [vmem:[#allocation11 + $0x24] sm:$0xf]
    %v471 = vld [vmem:[#allocation11 + $0x28] sm:$0xf]
    %v472 = vld [vmem:[#allocation11 + $0x2c] sm:$0xf]
    %v473 = vld [vmem:[#allocation11 + $0x30] sm:$0xf]
    %v474 = vld [vmem:[#allocation11 + $0x34] sm:$0xf]
    %v475 = vld [vmem:[#allocation11 + $0x38] sm:$0xf]
    %v476 = vld [vmem:[#allocation11 + $0x3c] sm:$0xf]
    %v493 = vunpack.c.l.b16 %v461
    %v494 = vunpack.c.l.b16 %v462
    %v495 = vunpack.c.l.b16 %v463
    %v496 = vunpack.c.l.b16 %v464
    %v497 = vunpack.c.l.b16 %v465
    %v498 = vunpack.c.l.b16 %v466
    %v499 = vunpack.c.l.b16 %v467
    %v500 = vunpack.c.l.b16 %v468
    %v501 = vunpack.c.l.b16 %v469
    %v502 = vunpack.c.l.b16 %v470
    %v503 = vunpack.c.l.b16 %v471
    %v504 = vunpack.c.l.b16 %v472
    %v505 = vunpack.c.l.b16 %v473
    %v506 = vunpack.c.l.b16 %v474
    %v507 = vunpack.c.l.b16 %v475
    %v508 = vunpack.c.l.b16 %v476
    %v509 = vpack.c.b16 %v494, %v493
    %v510 = vpack.c.b16 %v496, %v495
    %v511 = vpack.c.b16 %v498, %v497
    %v512 = vpack.c.b16 %v500, %v499
    %v513 = vpack.c.b16 %v502, %v501
    %v514 = vpack.c.b16 %v504, %v503
    %v515 = vpack.c.b16 %v506, %v505
    %v516 = vpack.c.b16 %v508, %v507
    %525 = vmatprep.subr.bf16.mxu0 0
    %526 = vmatpush1.bf16.msra.mxu0 %v509
    %527 = vmatprep.subr.bf16.mxu0 0
    %528 = vmatpush1.bf16.msra.mxu0 %v510
    %529 = vmatprep.subr.bf16.mxu0 0
    %530 = vmatpush1.bf16.msra.mxu0 %v511
    %531 = vmatprep.subr.bf16.mxu0 0
    %532 = vmatpush1.bf16.msra.mxu0 %v512
    %533 = vmatprep.subr.bf16.mxu0 0
    %534 = vmatpush1.bf16.msra.mxu0 %v513
    %535 = vmatprep.subr.bf16.mxu0 0
    %536 = vmatpush1.bf16.msra.mxu0 %v514
    %537 = vmatprep.subr.bf16.mxu0 0
    %538 = vmatpush1.bf16.msra.mxu0 %v515
    %539 = vmatprep.subr.bf16.mxu0 0
    %540 = vmatpush1.bf16.msra.mxu0 %v516
    %541 = vmatprep.subr.bf16.mxu0 0
    %542 = vmatpush1.bf16.msra.mxu0 0
    %543 = vmatprep.subr.bf16.mxu0 0
    %544 = vmatpush1.bf16.msra.mxu0 0
    %545 = vmatprep.subr.bf16.mxu0 0
    %546 = vmatpush1.bf16.msra.mxu0 0
    %547 = vmatprep.subr.bf16.mxu0 0
    %548 = vmatpush1.bf16.msra.mxu0 0
    %549 = vmatprep.subr.bf16.mxu0 0
    %550 = vmatpush1.bf16.msra.mxu0 0
    %551 = vmatprep.subr.bf16.mxu0 0
    %552 = vmatpush1.bf16.msra.mxu0 0
    %553 = vmatprep.subr.bf16.mxu0 0
    %554 = vmatpush1.bf16.msra.mxu0 0
    %555 = vmatprep.subr.bf16.mxu0 0
    %556 = vmatpush1.bf16.msra.mxu0 0
    %557 = vmatprep.mubr.bf16.mxu0 0
    %558 = vmatmul.mubr.bf16.gmra.mrb[0].mxu0 %v460
    %v559 = vpop.f32.mrb[0].mxu0
    %v560 = vadd.f32 0.0, %v559
    %v561 = vpop.f32.mrb[0].mxu0
    %v562 = vpop.f32.mrb[0].mxu0
    %v563 = vpop.f32.mrb[0].mxu0
    %564 = vdwg.mxu0
    %565 = vst [vmem:[#allocation13] sm:$0xff] %v560
    // Predicated region
    $region58: #{tpu_custom_call.1} parent=1 // pred_check
      _
    $region59: #{tpu_custom_call.1} parent=1 // pred_check_branch
      %567 = sbr.rel (0) target = $region61
    $region60: #{tpu_custom_call.1} parent=1 // pred_region
      %s569 = ssub.s32 128, 128
      %570 = vsyncadd [#allocation5], %s569
      %s572 = sshll.u32 [#allocation12], 4
      %s573 = int_to_ptr.vmem [resolvable:$true] %s572
      %575 = dma.vmem_to_hbm [thread:$0]  %s573, 128, %s8, [#allocation5]
    $region61: #{tpu_custom_call.1} parent=1 // pred_fallthru
      _
    // Predicated region
    $region62: #{tpu_custom_call.1} parent=1 // pred_check
      _
    $region63: #{tpu_custom_call.1} parent=1 // pred_check_branch
      %577 = sbr.rel (0) target = $region65
    $region64: #{tpu_custom_call.1} parent=1 // pred_region
      %s579 = ssub.s32 128, 128
      %580 = vsyncadd [#allocation14], %s579
      %s582 = sshll.u32 [#allocation13], 4
      %s583 = int_to_ptr.vmem [resolvable:$true] %s582
      %585 = dma.vmem_to_hbm [thread:$0]  %s583, 128, %s9, [#allocation14]
    $region65: #{tpu_custom_call.1} parent=1 // pred_fallthru
      _
    // Predicated region
    $region66: #{tpu_custom_call.1} parent=1 // pred_check
      _
    $region67: #{tpu_custom_call.1} parent=1 // pred_check_branch
      %587 = sbr.rel (0) target = $region69
    $region68: #{tpu_custom_call.1} parent=1 // pred_region
      %588 = dma.done [#allocation5], 128
    $region69: #{tpu_custom_call.1} parent=1 // pred_fallthru
      _
    // Predicated region
    $region70: #{tpu_custom_call.1} parent=1 // pred_check
      _
    $region71: #{tpu_custom_call.1} parent=1 // pred_check_branch
      %590 = sbr.rel (0) target = $region73
    $region72: #{tpu_custom_call.1} parent=1 // pred_region
      %591 = dma.done [#allocation14], 128
    $region73: #{tpu_custom_call.1} parent=1 // pred_fallthru
      _
    %592 = vsyncpa [#allocation4], 1
    %593 = vsyncpa [#allocation7], 1
    %594 = vsyncpa [#allocation10], 1
    %595 = vsyncpa [#allocation5], 1
    %596 = vsyncpa [#allocation14], 1

</llo_original>
